<compile_context>
chip_gen: v5e
topology: v5e:2x2
jax: 0.10.0
libtpu: 0.0.40
codegen_flags: <defaults>
</compile_context>

<pallas_src>
import jax
import jax.numpy as jnp
import numpy as np
from jax.experimental import pallas as pl
from jax.experimental.pallas import tpu as pltpu


# --------------------------------------------------------------------------- #
# Pallas kernel: one grid step == one batch sample.
# --------------------------------------------------------------------------- #
def _attention_kernel(x_ref, w1t_ref, w2_ref, wc_ref, bc_ref, we_ref,
                      bns_ref, bnb_ref, msa_ref, bigm_ref, bigb_ref, o_ref):
    f32 = jnp.float32
    bf16 = jnp.bfloat16
    x = x_ref[0]                                           # (C, HW) f32
    C, HW = x.shape
    cq = C // 4

    # ---- ChannelAttention: global max-pool + 1x1 MLP + sigmoid -------------
    # fc1/fc2 run on the VPU/XLU (broadcast-mul + reductions), not the MXU.
    pooled = jnp.max(x, axis=1, keepdims=True)             # (C, 1)
    h = jnp.maximum(
        jnp.sum(w1t_ref[...] * pooled, axis=0, keepdims=True), 0.0)   # (1, mip)
    ca = jax.nn.sigmoid(
        jnp.sum(w2_ref[...] * h, axis=1, keepdims=True))              # (C, 1)

    xs = x * ca                                            # (C, HW) channel-scaled

    # ---- SpatialAttention: channel-max of chunk 1, 7x7 conv (matmul), sigmoid
    m = jnp.max(xs[0:cq], axis=0, keepdims=True)           # (1, HW)
    sa = jax.nn.sigmoid(
        jnp.dot(m.astype(bf16), msa_ref[...], preferred_element_type=f32))

    # ---- sa1..sa4 and folded sa_fusion: ONE wide matmul against the
    #      pre-composed operator block [C1 | C1C2 | C1C2C3 | C1..C4 | sum CkFk]
    sa_all = (jnp.dot(sa.astype(bf16), bigm_ref[...], preferred_element_type=f32)
              + bigb_ref[...])                             # (1, 5*HW)
    sa1 = sa_all[:, 0 * HW:1 * HW]
    sa2 = sa_all[:, 1 * HW:2 * HW]
    sa3 = sa_all[:, 2 * HW:3 * HW]
    sa4 = sa_all[:, 3 * HW:4 * HW]
    sa_fus = sa_all[:, 4 * HW:5 * HW]

    x1s = sa1 * xs[0 * cq:1 * cq]
    x2s = sa2 * xs[1 * cq:2 * cq]
    x3s = sa3 * xs[2 * cq:3 * cq]
    x4s = sa4 * xs[3 * cq:4 * cq]

    # ---- ca_conv (1x1 + bias); off the critical path, tiny MXU matmul -------
    ca_fus = jnp.dot(wc_ref[...], ca, preferred_element_type=f32) + bc_ref[...]

    # ---- conv_end: single K=2C matmul over concat([xs,x1s..x4s]) + BN + ReLU
    cat = jnp.concatenate([xs, x1s, x2s, x3s, x4s], axis=0)          # (2C, HW)
    z = jnp.dot(we_ref[...], cat, preferred_element_type=f32)        # (oup, HW)
    # TODO(synk): BatchNorm implemented in eval mode (running stats); PyTorch
    # train-mode batch statistics are not reproduced.
    z = jnp.maximum(z * bns_ref[...] + bnb_ref[...], 0.0)

    o_ref[0] = (z * sa_fus * ca_fus).astype(o_ref.dtype)


# --------------------------------------------------------------------------- #
# Glue: dense "same padding" conv operator matrix from a KxK weight.
# out_flat = x_flat @ M, with x_flat row-major (W fastest).
# --------------------------------------------------------------------------- #
def conv_operator_matrix(w2d, H, W):
    K = w2d.shape[-1]
    p = K // 2
    n = jnp.arange(H * W)
    i = n // W
    j = n % W
    di = i[:, None] - i[None, :]          # rows = input pos m, cols = output pos n
    dj = j[:, None] - j[None, :]
    valid = (jnp.abs(di) <= p) & (jnp.abs(dj) <= p)
    wi = jnp.clip(di + p, 0, K - 1)
    wj = jnp.clip(dj + p, 0, K - 1)
    return jnp.where(valid, w2d[wi, wj], 0.0).astype(jnp.float32)


def precompute_attention_constants(p, H, W, oup):
    """One-time (per weight set) precompute of kernel-ready operands."""
    f32, bf16 = jnp.float32, jnp.bfloat16
    HW = H * W
    C = p['w1'].shape[1]

    # 7x7 spatial-attention operator.
    msa = conv_operator_matrix(p['w_sa'], H, W)

    # Pre-compose the chained 3x3 convs: sa_k = sa @ Ck + bk_row.
    M = [conv_operator_matrix(p['w_chain'][k], H, W) for k in range(4)]
    Fm = [conv_operator_matrix(p['w_fus'][0, k], H, W) for k in range(4)]
    ones_row = jnp.ones((1, HW), f32)

    Cmats, brows = [], []
    Cprev, bprev = None, jnp.zeros((1, HW), f32)
    for k in range(4):
        Ck = M[k] if Cprev is None else Cprev @ M[k]
        bk = bprev @ M[k] + p['b_chain'][k] * ones_row
        Cmats.append(Ck)
        brows.append(bk)
        Cprev, bprev = Ck, bk

    # Fold sa_fusion: sum_k sa_k @ Fk + b_fus == sa @ (sum Ck Fk) + bias row.
    ffold = sum(Cmats[k] @ Fm[k] for k in range(4))
    bfold = sum(brows[k] @ Fm[k] for k in range(4)) + p['b_fus'][0] * ones_row

    bigM = jnp.concatenate(Cmats + [ffold], axis=1).astype(bf16)   # (HW, 5*HW)
    bigB = jnp.concatenate(brows + [bfold], axis=1)                # (1, 5*HW) f32

    bn_scale = (p['bn_gamma'] / jnp.sqrt(p['bn_var'] + 1e-5)).reshape(oup, 1)
    bn_shift = (p['bn_beta'] - p['bn_mean'] * bn_scale[:, 0]).reshape(oup, 1)

    return dict(
        w1t=jnp.asarray(p['w1']).T,          # (C, mip) — fc1 weight, transposed
        w2=jnp.asarray(p['w2']),             # (C, mip) — fc2 weight
        wc=jnp.asarray(p['wc']),             # (oup, C) — ca_conv weight
        bc=jnp.asarray(p['bc']).reshape(oup, 1),
        we=jnp.asarray(p['we']),             # (oup, 2C) — conv_end 1x1 weight
        bn_scale=bn_scale, bn_shift=bn_shift,
        msa=msa.astype(bf16), bigM=bigM, bigB=bigB,
    )


def attention_forward(x, consts, oup):
    B, C, H, W = x.shape
    HW = H * W
    mip = consts['w1t'].shape[1]
    x2d = x.reshape(B, C, HW).astype(jnp.float32)

    c2 = lambda b: (0, 0)
    in_specs = [
        pl.BlockSpec((1, C, HW), lambda b: (b, 0, 0)),   # x
        pl.BlockSpec((C, mip), c2),                      # fc1 weight (transposed)
        pl.BlockSpec((C, mip), c2),                      # fc2 weight
        pl.BlockSpec((oup, C), c2),                      # ca_conv weight
        pl.BlockSpec((oup, 1), c2),                      # ca_conv bias
        pl.BlockSpec((oup, 2 * C), c2),                  # conv_end weight (full)
        pl.BlockSpec((oup, 1), c2),                      # BN scale
        pl.BlockSpec((oup, 1), c2),                      # BN shift
        pl.BlockSpec((HW, HW), c2),                      # 7x7 operator (bf16)
        pl.BlockSpec((HW, 5 * HW), c2),                  # composed chain+fusion ops (bf16)
        pl.BlockSpec((1, 5 * HW), c2),                   # composed bias rows (f32)
    ]

    out2d = pl.pallas_call(
        _attention_kernel,
        out_shape=jax.ShapeDtypeStruct((B, oup, HW), jnp.float32),
        grid=(B,),
        in_specs=in_specs,
        out_specs=pl.BlockSpec((1, oup, HW), lambda b: (b, 0, 0)),
        compiler_params=pltpu.CompilerParams(
            dimension_semantics=("parallel",)),
    )(x2d, consts['w1t'], consts['w2'], consts['wc'], consts['bc'],
      consts['we'], consts['bn_scale'], consts['bn_shift'],
      consts['msa'], consts['bigM'], consts['bigB'])

    return out2d.reshape(B, oup, H, W)


# --------------------------------------------------------------------------- #
# Pure-JAX reference (mirrors the PyTorch forward, eval-mode BN).
# --------------------------------------------------------------------------- #
def reference_forward(x, p):
    B, C, H, W = x.shape

    def sconv(inp, w, b=None):
        K = w.shape[-1]
        pad = K // 2
        out = jax.lax.conv_general_dilated(
            inp, w, window_strides=(1, 1),
            padding=[(pad, pad), (pad, pad)],
            dimension_numbers=('NCHW', 'OIHW', 'NCHW'))
        if b is not None:
            out = out + b.reshape(1, -1, 1, 1)
        return out

    pooled = jnp.max(x, axis=(2, 3), keepdims=True)
    h = jax.nn.relu(jnp.einsum('mc,bcuv->bmuv', p['w1'], pooled))
    ca = jax.nn.sigmoid(jnp.einsum('cm,bmuv->bcuv', p['w2'], h))
    xs = x * ca
    cq = C // 4
    chunks = [xs[:, k * cq:(k + 1) * cq] for k in range(4)]
    sa = jax.nn.sigmoid(
        sconv(jnp.max(chunks[0], axis=1, keepdims=True), p['w_sa'][None, None]))
    sa1 = sconv(sa,  p['w_chain'][0][None, None], p['b_chain'][0:1])
    sa2 = sconv(sa1, p['w_chain'][1][None, None], p['b_chain'][1:2])
    sa3 = sconv(sa2, p['w_chain'][2][None, None], p['b_chain'][2:3])
    sa4 = sconv(sa3, p['w_chain'][3][None, None], p['b_chain'][3:4])
    sas = [sa1, sa2, sa3, sa4]
    scaled = [s * c for s, c in zip(sas, chunks)]
    ca_fus = jnp.einsum('oc,bcuv->bouv', p['wc'], ca) + p['bc'].reshape(1, -1, 1, 1)
    sa_fus = sconv(jnp.concatenate(sas, axis=1), p['w_fus'], p['b_fus'])
    cat = jnp.concatenate([xs] + scaled, axis=1)
    z = jnp.einsum('oc,bcuv->bouv', p['we'], cat)
    bn_scale = p['bn_gamma'] / jnp.sqrt(p['bn_var'] + 1e-5)
    bn_shift = p['bn_beta'] - p['bn_mean'] * bn_scale
    z = jax.nn.relu(z * bn_scale.reshape(1, -1, 1, 1) + bn_shift.reshape(1, -1, 1, 1))
    return z * sa_fus * ca_fus


# --------------------------------------------------------------------------- #
if __name__ == "__main__":
    B, C, H, W = 2, 32, 16, 16        # dim = 32  -> chunks of 8 channels
    oup = 16
    mip = max(8, C // 16)
    f32 = jnp.float32

    key = jax.random.PRNGKey(0)
    ks = jax.random.split(key, 16)
    params = dict(
        w1=0.3 * jax.random.normal(ks[0], (mip, C), f32),        # ca.fc1 (no bias)
        w2=0.3 * jax.random.normal(ks[1], (C, mip), f32),        # ca.fc2 (no bias)
        w_sa=0.2 * jax.random.normal(ks[2], (7, 7), f32),        # sa.conv1 (no bias)
        w_chain=0.2 * jax.random.normal(ks[3], (4, 3, 3), f32),  # sa_conv1..4
        b_chain=0.1 * jax.random.normal(ks[4], (4,), f32),
        w_fus=0.2 * jax.random.normal(ks[5], (1, 4, 3, 3), f32), # sa_fusion
        b_fus=0.1 * jax.random.normal(ks[6], (1,), f32),
        wc=0.3 * jax.random.normal(ks[7], (oup, C), f32),        # ca_conv
        bc=0.1 * jax.random.normal(ks[8], (oup,), f32),
        we=0.3 * jax.random.normal(ks[9], (oup, 2 * C), f32),    # conv_end 1x1 (no bias)
        bn_gamma=jnp.ones((oup,), f32),   # fresh BatchNorm2d, eval-mode stats
        bn_beta=jnp.zeros((oup,), f32),
        bn_mean=jnp.zeros((oup,), f32),
        bn_var=jnp.ones((oup,), f32),
    )
    x = jax.random.normal(ks[10], (B, C, H, W), f32)

    # One-time precompute of kernel-ready constants (not on the per-call path).
    consts = jax.tree_util.tree_map(jax.block_until_ready,
                                    precompute_attention_constants(params, H, W, oup))

    out = attention_forward(x, consts, oup)
    out = jax.block_until_ready(out)

    ref = reference_forward(x, params)
    np.testing.assert_allclose(np.asarray(out), np.asarray(ref),
                               atol=5e-2, rtol=5e-2)
    print("KERNEL_OK")
</pallas_src>

<mosaic_0001>
module attributes {stable_mosaic.version = 11 : i64} {
  func.func @_attention_kernel(%arg0: i32, %arg1: memref<1x32x256xf32, #tpu.memory_space<vmem>>, %arg2: memref<32x8xf32, #tpu.memory_space<vmem>>, %arg3: memref<32x8xf32, #tpu.memory_space<vmem>>, %arg4: memref<16x32xf32, #tpu.memory_space<vmem>>, %arg5: memref<16x1xf32, #tpu.memory_space<vmem>>, %arg6: memref<16x64xf32, #tpu.memory_space<vmem>>, %arg7: memref<16x1xf32, #tpu.memory_space<vmem>>, %arg8: memref<16x1xf32, #tpu.memory_space<vmem>>, %arg9: memref<256x256xbf16, #tpu.memory_space<vmem>>, %arg10: memref<256x1280xbf16, #tpu.memory_space<vmem>>, %arg11: memref<1x1280xf32, #tpu.memory_space<vmem>>, %arg12: memref<1x16x256xf32, #tpu.memory_space<vmem>>) attributes {dimension_semantics = [#tpu.dimension_semantics<parallel>], iteration_bounds = array<i64: 2>, scalar_prefetch = 0 : i64, scratch_operands = 0 : i64, tpu.core_type = #tpu.core_type<tc>, window_params = [{transform_indices = @transform_0, window_bounds = array<i64: 1, 32, 256>}, {pipeline_mode = #tpu.pipeline_mode<synchronous>, transform_indices = @transform_1, window_bounds = array<i64: 32, 8>}, {pipeline_mode = #tpu.pipeline_mode<synchronous>, transform_indices = @transform_2, window_bounds = array<i64: 32, 8>}, {pipeline_mode = #tpu.pipeline_mode<synchronous>, transform_indices = @transform_3, window_bounds = array<i64: 16, 32>}, {pipeline_mode = #tpu.pipeline_mode<synchronous>, transform_indices = @transform_4, window_bounds = array<i64: 16, 1>}, {pipeline_mode = #tpu.pipeline_mode<synchronous>, transform_indices = @transform_5, window_bounds = array<i64: 16, 64>}, {pipeline_mode = #tpu.pipeline_mode<synchronous>, transform_indices = @transform_6, window_bounds = array<i64: 16, 1>}, {pipeline_mode = #tpu.pipeline_mode<synchronous>, transform_indices = @transform_7, window_bounds = array<i64: 16, 1>}, {pipeline_mode = #tpu.pipeline_mode<synchronous>, transform_indices = @transform_8, window_bounds = array<i64: 256, 256>}, {pipeline_mode = #tpu.pipeline_mode<synchronous>, transform_indices = @transform_9, window_bounds = array<i64: 256, 1280>}, {pipeline_mode = #tpu.pipeline_mode<synchronous>, transform_indices = @transform_10, window_bounds = array<i64: 1, 1280>}, {transform_indices = @transform_11, window_bounds = array<i64: 1, 16, 256>}]} {
    %c0 = arith.constant 0 : index
    %c0_0 = arith.constant 0 : index
    %c0_1 = arith.constant 0 : index
    %0 = vector.load %arg1[%c0, %c0_0, %c0_1] : memref<1x32x256xf32, #tpu.memory_space<vmem>>, vector<1x32x256xf32>
    %1 = vector.shape_cast %0 : vector<1x32x256xf32> to vector<32x256xf32>
    %cst = arith.constant dense<0xFF800000> : vector<32xf32>
    %2 = vector.multi_reduction <maximumf>, %1, %cst [1] : vector<32x256xf32> to vector<32xf32>
    %3 = vector.shape_cast %2 : vector<32xf32> to vector<32x1xf32>
    %c0_2 = arith.constant 0 : index
    %c0_3 = arith.constant 0 : index
    %4 = vector.load %arg2[%c0_2, %c0_3] : memref<32x8xf32, #tpu.memory_space<vmem>>, vector<32x8xf32>
    %5 = vector.broadcast %3 : vector<32x1xf32> to vector<32x8xf32>
    %6 = arith.mulf %4, %5 : vector<32x8xf32>
    %cst_4 = arith.constant dense<0.000000e+00> : vector<8xf32>
    %7 = vector.multi_reduction <add>, %6, %cst_4 [0] : vector<32x8xf32> to vector<8xf32>
    %8 = vector.shape_cast %7 : vector<8xf32> to vector<1x8xf32>
    %cst_5 = arith.constant 0.000000e+00 : f32
    %9 = vector.broadcast %cst_5 : f32 to vector<1x8xf32>
    %10 = arith.maximumf %8, %9 : vector<1x8xf32>
    %c0_6 = arith.constant 0 : index
    %c0_7 = arith.constant 0 : index
    %11 = vector.load %arg3[%c0_6, %c0_7] : memref<32x8xf32, #tpu.memory_space<vmem>>, vector<32x8xf32>
    %12 = vector.broadcast %10 : vector<1x8xf32> to vector<32x8xf32>
    %13 = arith.mulf %11, %12 : vector<32x8xf32>
    %cst_8 = arith.constant dense<0.000000e+00> : vector<32xf32>
    %14 = vector.multi_reduction <add>, %13, %cst_8 [1] : vector<32x8xf32> to vector<32xf32>
    %15 = vector.shape_cast %14 : vector<32xf32> to vector<32x1xf32>
    %16 = arith.negf %15 : vector<32x1xf32>
    %17 = math.exp %16 : vector<32x1xf32>
    %cst_9 = arith.constant 1.000000e+00 : f32
    %18 = vector.broadcast %cst_9 : f32 to vector<32x1xf32>
    %19 = arith.addf %18, %17 : vector<32x1xf32>
    %20 = arith.divf %18, %19 : vector<32x1xf32>
    %21 = vector.broadcast %20 : vector<32x1xf32> to vector<32x256xf32>
    %22 = arith.mulf %1, %21 : vector<32x256xf32>
    %23 = vector.extract_strided_slice %22 {offsets = [0, 0], sizes = [8, 256], strides = [1, 1]} : vector<32x256xf32> to vector<8x256xf32>
    %cst_10 = arith.constant dense<0xFF800000> : vector<256xf32>
    %24 = vector.multi_reduction <maximumf>, %23, %cst_10 [0] : vector<8x256xf32> to vector<256xf32>
    %25 = vector.shape_cast %24 : vector<256xf32> to vector<1x256xf32>
    %26 = arith.truncf %25 : vector<1x256xf32> to vector<1x256xbf16>
    %c0_11 = arith.constant 0 : index
    %c0_12 = arith.constant 0 : index
    %27 = vector.load %arg9[%c0_11, %c0_12] : memref<256x256xbf16, #tpu.memory_space<vmem>>, vector<256x256xbf16>
    %cst_13 = arith.constant dense<0.000000e+00> : vector<1x256xf32>
    %28 = tpu.matmul %26, %27, %cst_13 {dimension_numbers = #tpu.dot_dimension_numbers<[1], [0], [0], [1], [0, 0, 1, 1], [], []>} : vector<1x256xbf16>, vector<256x256xbf16>, vector<1x256xf32> -> vector<1x256xf32>
    %29 = arith.negf %28 : vector<1x256xf32>
    %30 = math.exp %29 : vector<1x256xf32>
    %cst_14 = arith.constant 1.000000e+00 : f32
    %31 = vector.broadcast %cst_14 : f32 to vector<1x256xf32>
    %32 = arith.addf %31, %30 : vector<1x256xf32>
    %33 = arith.divf %31, %32 : vector<1x256xf32>
    %34 = arith.truncf %33 : vector<1x256xf32> to vector<1x256xbf16>
    %c0_15 = arith.constant 0 : index
    %c0_16 = arith.constant 0 : index
    %35 = vector.load %arg10[%c0_15, %c0_16] : memref<256x1280xbf16, #tpu.memory_space<vmem>>, vector<256x1280xbf16>
    %cst_17 = arith.constant dense<0.000000e+00> : vector<1x1280xf32>
    %36 = tpu.matmul %34, %35, %cst_17 {dimension_numbers = #tpu.dot_dimension_numbers<[1], [0], [0], [1], [0, 0, 1, 1], [], []>} : vector<1x256xbf16>, vector<256x1280xbf16>, vector<1x1280xf32> -> vector<1x1280xf32>
    %c0_18 = arith.constant 0 : index
    %c0_19 = arith.constant 0 : index
    %37 = vector.load %arg11[%c0_18, %c0_19] : memref<1x1280xf32, #tpu.memory_space<vmem>>, vector<1x1280xf32>
    %38 = arith.addf %36, %37 : vector<1x1280xf32>
    %39 = vector.extract_strided_slice %38 {offsets = [0, 0], sizes = [1, 256], strides = [1, 1]} : vector<1x1280xf32> to vector<1x256xf32>
    %40 = vector.extract_strided_slice %38 {offsets = [0, 256], sizes = [1, 256], strides = [1, 1]} : vector<1x1280xf32> to vector<1x256xf32>
    %41 = vector.extract_strided_slice %38 {offsets = [0, 512], sizes = [1, 256], strides = [1, 1]} : vector<1x1280xf32> to vector<1x256xf32>
    %42 = vector.extract_strided_slice %38 {offsets = [0, 768], sizes = [1, 256], strides = [1, 1]} : vector<1x1280xf32> to vector<1x256xf32>
    %43 = vector.extract_strided_slice %38 {offsets = [0, 1024], sizes = [1, 256], strides = [1, 1]} : vector<1x1280xf32> to vector<1x256xf32>
    %44 = vector.extract_strided_slice %22 {offsets = [0, 0], sizes = [8, 256], strides = [1, 1]} : vector<32x256xf32> to vector<8x256xf32>
    %45 = vector.broadcast %39 : vector<1x256xf32> to vector<8x256xf32>
    %46 = arith.mulf %45, %44 : vector<8x256xf32>
    %47 = vector.extract_strided_slice %22 {offsets = [8, 0], sizes = [8, 256], strides = [1, 1]} : vector<32x256xf32> to vector<8x256xf32>
    %48 = vector.broadcast %40 : vector<1x256xf32> to vector<8x256xf32>
    %49 = arith.mulf %48, %47 : vector<8x256xf32>
    %50 = vector.extract_strided_slice %22 {offsets = [16, 0], sizes = [8, 256], strides = [1, 1]} : vector<32x256xf32> to vector<8x256xf32>
    %51 = vector.broadcast %41 : vector<1x256xf32> to vector<8x256xf32>
    %52 = arith.mulf %51, %50 : vector<8x256xf32>
    %53 = vector.extract_strided_slice %22 {offsets = [24, 0], sizes = [8, 256], strides = [1, 1]} : vector<32x256xf32> to vector<8x256xf32>
    %54 = vector.broadcast %42 : vector<1x256xf32> to vector<8x256xf32>
    %55 = arith.mulf %54, %53 : vector<8x256xf32>
    %c0_20 = arith.constant 0 : index
    %c0_21 = arith.constant 0 : index
    %56 = vector.load %arg4[%c0_20, %c0_21] : memref<16x32xf32, #tpu.memory_space<vmem>>, vector<16x32xf32>
    %cst_22 = arith.constant dense<0.000000e+00> : vector<16x1xf32>
    %57 = tpu.matmul %56, %20, %cst_22 {dimension_numbers = #tpu.dot_dimension_numbers<[1], [0], [0], [1], [0, 0, 1, 1], [], []>} : vector<16x32xf32>, vector<32x1xf32>, vector<16x1xf32> -> vector<16x1xf32>
    %c0_23 = arith.constant 0 : index
    %c0_24 = arith.constant 0 : index
    %58 = vector.load %arg5[%c0_23, %c0_24] : memref<16x1xf32, #tpu.memory_space<vmem>>, vector<16x1xf32>
    %59 = arith.addf %57, %58 : vector<16x1xf32>
    %60 = tpu.concatenate %22, %46, %49, %52, %55 in 0 : vector<32x256xf32>, vector<8x256xf32>, vector<8x256xf32>, vector<8x256xf32>, vector<8x256xf32> -> vector<64x256xf32>
    %c0_25 = arith.constant 0 : index
    %c0_26 = arith.constant 0 : index
    %61 = vector.load %arg6[%c0_25, %c0_26] : memref<16x64xf32, #tpu.memory_space<vmem>>, vector<16x64xf32>
    %cst_27 = arith.constant dense<0.000000e+00> : vector<16x256xf32>
    %62 = tpu.matmul %61, %60, %cst_27 {dimension_numbers = #tpu.dot_dimension_numbers<[1], [0], [0], [1], [0, 0, 1, 1], [], []>} : vector<16x64xf32>, vector<64x256xf32>, vector<16x256xf32> -> vector<16x256xf32>
    %c0_28 = arith.constant 0 : index
    %c0_29 = arith.constant 0 : index
    %63 = vector.load %arg7[%c0_28, %c0_29] : memref<16x1xf32, #tpu.memory_space<vmem>>, vector<16x1xf32>
    %64 = vector.broadcast %63 : vector<16x1xf32> to vector<16x256xf32>
    %65 = arith.mulf %62, %64 : vector<16x256xf32>
    %c0_30 = arith.constant 0 : index
    %c0_31 = arith.constant 0 : index
    %66 = vector.load %arg8[%c0_30, %c0_31] : memref<16x1xf32, #tpu.memory_space<vmem>>, vector<16x1xf32>
    %67 = vector.broadcast %66 : vector<16x1xf32> to vector<16x256xf32>
    %68 = arith.addf %65, %67 : vector<16x256xf32>
    %cst_32 = arith.constant 0.000000e+00 : f32
    %69 = vector.broadcast %cst_32 : f32 to vector<16x256xf32>
    %70 = arith.maximumf %68, %69 : vector<16x256xf32>
    %71 = vector.broadcast %43 : vector<1x256xf32> to vector<16x256xf32>
    %72 = arith.mulf %70, %71 : vector<16x256xf32>
    %73 = vector.broadcast %59 : vector<16x1xf32> to vector<16x256xf32>
    %74 = arith.mulf %72, %73 : vector<16x256xf32>
    %c0_33 = arith.constant 0 : index
    %c0_34 = arith.constant 0 : index
    %c0_35 = arith.constant 0 : index
    %75 = vector.load %arg12[%c0_33, %c0_34, %c0_35] : memref<1x16x256xf32, #tpu.memory_space<vmem>>, vector<1x16x256xf32>
    %76 = vector.shape_cast %75 : vector<1x16x256xf32> to vector<16x256xf32>
    %77 = vector.shape_cast %74 : vector<16x256xf32> to vector<1x16x256xf32>
    tpu.vector_store %arg12[%c0_33, %c0_34, %c0_35], %77 {strides = array<i32>} : memref<1x16x256xf32, #tpu.memory_space<vmem>>, vector<1x16x256xf32>,
    return
  }
  func.func @transform_0(%arg0: i32) -> (i32, i32, i32) {
    %c0_i32 = arith.constant 0 : i32
    %c0_i32_0 = arith.constant 0 : i32
    %c0_i32_1 = arith.constant 0 : i32
    return %arg0, %c0_i32, %c0_i32_0 : i32, i32, i32
  }
  func.func @transform_1(%arg0: i32) -> (i32, i32) {
    %c0_i32 = arith.constant 0 : i32
    %c0_i32_0 = arith.constant 0 : i32
    %c0_i32_1 = arith.constant 0 : i32
    return %c0_i32, %c0_i32_0 : i32, i32
  }
  func.func @transform_2(%arg0: i32) -> (i32, i32) {
    %c0_i32 = arith.constant 0 : i32
    %c0_i32_0 = arith.constant 0 : i32
    %c0_i32_1 = arith.constant 0 : i32
    return %c0_i32, %c0_i32_0 : i32, i32
  }
  func.func @transform_3(%arg0: i32) -> (i32, i32) {
    %c0_i32 = arith.constant 0 : i32
    %c0_i32_0 = arith.constant 0 : i32
    %c0_i32_1 = arith.constant 0 : i32
    return %c0_i32, %c0_i32_0 : i32, i32
  }
  func.func @transform_4(%arg0: i32) -> (i32, i32) {
    %c0_i32 = arith.constant 0 : i32
    %c0_i32_0 = arith.constant 0 : i32
    %c0_i32_1 = arith.constant 0 : i32
    return %c0_i32, %c0_i32_0 : i32, i32
  }
  func.func @transform_5(%arg0: i32) -> (i32, i32) {
    %c0_i32 = arith.constant 0 : i32
    %c0_i32_0 = arith.constant 0 : i32
    %c0_i32_1 = arith.constant 0 : i32
    return %c0_i32, %c0_i32_0 : i32, i32
  }
  func.func @transform_6(%arg0: i32) -> (i32, i32) {
    %c0_i32 = arith.constant 0 : i32
    %c0_i32_0 = arith.constant 0 : i32
    %c0_i32_1 = arith.constant 0 : i32
    return %c0_i32, %c0_i32_0 : i32, i32
  }
  func.func @transform_7(%arg0: i32) -> (i32, i32) {
    %c0_i32 = arith.constant 0 : i32
    %c0_i32_0 = arith.constant 0 : i32
    %c0_i32_1 = arith.constant 0 : i32
    return %c0_i32, %c0_i32_0 : i32, i32
  }
  func.func @transform_8(%arg0: i32) -> (i32, i32) {
    %c0_i32 = arith.constant 0 : i32
    %c0_i32_0 = arith.constant 0 : i32
    %c0_i32_1 = arith.constant 0 : i32
    return %c0_i32, %c0_i32_0 : i32, i32
  }
  func.func @transform_9(%arg0: i32) -> (i32, i32) {
    %c0_i32 = arith.constant 0 : i32
    %c0_i32_0 = arith.constant 0 : i32
    %c0_i32_1 = arith.constant 0 : i32
    return %c0_i32, %c0_i32_0 : i32, i32
  }
  func.func @transform_10(%arg0: i32) -> (i32, i32) {
    %c0_i32 = arith.constant 0 : i32
    %c0_i32_0 = arith.constant 0 : i32
    %c0_i32_1 = arith.constant 0 : i32
    return %c0_i32, %c0_i32_0 : i32, i32
  }
  func.func @transform_11(%arg0: i32) -> (i32, i32, i32) {
    %c0_i32 = arith.constant 0 : i32
    %c0_i32_0 = arith.constant 0 : i32
    %c0_i32_1 = arith.constant 0 : i32
    return %arg0, %c0_i32, %c0_i32_0 : i32, i32, i32
  }
}

</mosaic_0001>

<llo_original>
// kernel: tpu_custom_call.1
$region0: #{tpu_custom_call.1}
  #allocation0 [shape = 'u32[]', space=smem, size = 0x4, offset = 0x4, fixed_abs, tag = 'smem constant byte address 0x4 - core index']
  #allocation1 [shape = 'u32[72,128]{1,0:T(1,128)}', space=vmem, size = 0x9000, scoped, tag = 'internal scratch']
  %s0 = inlined_call_operand.hbm [shape: f32[2,32,256], index: 0, kind: input, shape index: {}]
  %s1 = inlined_call_operand.vmem [shape: f32[32,8], index: 1, kind: input, shape index: {}]
  %s2 = inlined_call_operand.vmem [shape: f32[32,8], index: 2, kind: input, shape index: {}]
  %s3 = inlined_call_operand.vmem [shape: f32[16,32], index: 3, kind: input, shape index: {}]
  %s4 = inlined_call_operand.vmem [shape: f32[16,1], index: 4, kind: input, shape index: {}]
  %s5 = inlined_call_operand.vmem [shape: f32[16,64], index: 5, kind: input, shape index: {}]
  %s6 = inlined_call_operand.vmem [shape: f32[16,1], index: 6, kind: input, shape index: {}]
  %s7 = inlined_call_operand.vmem [shape: f32[16,1], index: 7, kind: input, shape index: {}]
  %s8 = inlined_call_operand.hbm [shape: bf16[256,256], index: 8, kind: input, shape index: {}]
  %s9 = inlined_call_operand.hbm [shape: bf16[256,1280], index: 9, kind: input, shape index: {}]
  %s10 = inlined_call_operand.vmem [shape: f32[1,1280], index: 10, kind: input, shape index: {}]
  %s11 = inlined_call_operand.hbm [shape: f32[2,16,256], index: 11, kind: output, shape index: {}]
  %s12 = sld [smem:[#allocation0]]
  $region89: #{tpu_custom_call.1} parent=0
    _
  %s14 = ssub.s32 1, %s12
  %s15 = scalar_select 0, %s14, %s12
  $region1: #{tpu_custom_call.1} parent=0
    #allocation2 [shape = 'u8[65536]{0}', space=vmem, size = 0x10000, scoped, tag = 'input window, operand 0']
    #allocation3 [shape = 's32[2]{0}', space=sflag, size = 0x8, scoped, tag = 'scoped memory for tpu_custom_call.1']
    #allocation4 [shape = 's32[2]{0}', space=sflag, size = 0x8, scoped, tag = 'scoped memory for tpu_custom_call.1']
    #allocation5 [shape = 'u8[131072]{0}', space=vmem, size = 0x20000, scoped, tag = 'input window, operand 8, single buffered']
    #allocation6 [shape = 's32[1]{0}', space=sflag, size = 0x4, scoped, tag = 'scoped memory for tpu_custom_call.1']
    #allocation7 [shape = 'u8[655360]{0}', space=vmem, size = 0xa0000, scoped, tag = 'input window, operand 9, single buffered']
    #allocation8 [shape = 'u8[32768]{0}', space=vmem, size = 0x8000, scoped, tag = 'output window, operand 0']
    %16 = vsyncpa [#allocation3], 0
    %s17 = scalar_lea.sflag [#allocation3], 1
    %18 = vsyncpa %s17, 0
    %19 = vsyncpa [#allocation6], 0
    %20 = vsyncpa [#allocation4], 0
    %s21 = scalar_lea.sflag [#allocation4], 1
    %22 = vsyncpa %s21, 0
    loop: start=0, step=1, limit=4
    $region2: #{tpu_custom_call.1} parent=1 // loop_pre_header
      _
    $region3: #{tpu_custom_call.1} parent=1 // loop_header
      %s24 = sphi 0, %s28
      %p25 = scmp.ge.s32.totalorder %s24, 4
      %s34 = sphi 0, %s36
      %s37 = sphi 0, %s34
      %s38 = sphi 0, %s37
      %s54 = sphi 0, %s38
      %s58 = sphi 0, %s58
      %s60 = sphi 0, %s58
      %s61 = sphi 0, %s60
      %s75 = sphi 0, %s61
      %s79 = sphi 0, %s79
      %s81 = sphi 0, %s79
      %s82 = sphi 0, %s81
      %s96 = sphi 0, %s82
      %s100 = sphi 0, %s100
      %s102 = sphi 0, %s100
      %s103 = sphi 0, %s102
      %s117 = sphi 0, %s103
      %s121 = sphi 0, %s121
      %s123 = sphi 0, %s121
      %s124 = sphi 0, %s123
      %s138 = sphi 0, %s124
      %s142 = sphi 0, %s142
      %s144 = sphi 0, %s142
      %s145 = sphi 0, %s144
      %s159 = sphi 0, %s145
      %s163 = sphi 0, %s163
      %s165 = sphi 0, %s163
      %s166 = sphi 0, %s165
      %s180 = sphi 0, %s166
      %s184 = sphi 0, %s184
      %s186 = sphi 0, %s184
      %s187 = sphi 0, %s186
      %s201 = sphi 0, %s187
      %s205 = sphi 0, %s205
      %s207 = sphi 0, %s205
      %s208 = sphi 0, %s207
      %s222 = sphi 0, %s208
      %s226 = sphi 0, %s226
      %s228 = sphi 0, %s226
      %s229 = sphi 0, %s228
      %s243 = sphi 0, %s229
      %s247 = sphi 0, %s247
      %s249 = sphi 0, %s247
      %s250 = sphi 0, %s249
      %s264 = sphi 0, %s250
      %s270 = sphi 0, %s272
      %s273 = sphi 0, %s270
      %s274 = sphi 0, %s273
      %s290 = sphi 0, %s274
    $region4: #{tpu_custom_call.1} parent=1 // loop_header_branch
      %27 = sbr.rel (%p25) target = $region8
    $region5: #{tpu_custom_call.1} parent=1 // loop_body
      %s29 = ssub.s32 %s24, 1
      %s30 = ssub.s32 %s24, 2
      %s31 = sadd.s32 %s24, 1
      %s32 = ssub.s32 %s24, %s31
      %p33 = scmp.eq.s32.totalorder %s32, 0
      %s35 = sadd.s32 %s34, 1
      %s36 = scalar_select %p33, %s34, %s35
      %p39 = pneg %p33
      %p40 = scmp.eq.s32.totalorder %s24, 1
      %p41 = por %p39, %p40
      %p42 = scmp.ne.s32.totalorder %s34, %s37
      %p43 = scmp.eq.s32.totalorder %s24, 0
      %p44 = por %p42, %p43
      %p45 = scmp.ne.s32.totalorder %s34, %s37
      %p46 = scmp.eq.s32.totalorder %s29, 1
      %p47 = por %p45, %p46
      %p48 = scmp.ne.s32.totalorder %s37, %s38
      %p49 = scmp.eq.s32.totalorder %s29, 0
      %p50 = por %p48, %p49
      %p51 = scmp.ne.s32.totalorder %s37, %s38
      %p52 = scmp.eq.s32.totalorder %s30, 1
      %p53 = por %p51, %p52
      %p55 = scmp.ne.s32.totalorder %s38, %s54
      %p56 = scmp.eq.s32.totalorder %s30, 0
      %p57 = por %p55, %p56
      %s59 = sadd.s32 %s58, 1
      %p62 = scmp.eq.s32.totalorder %s24, 1
      %p63 = scmp.ne.s32.totalorder %s58, %s60
      %p64 = scmp.eq.s32.totalorder %s24, 0
      %p65 = por %p63, %p64
      %p66 = scmp.ne.s32.totalorder %s58, %s60
      %p67 = scmp.eq.s32.totalorder %s29, 1
      %p68 = por %p66, %p67
      %p69 = scmp.ne.s32.totalorder %s60, %s61
      %p70 = scmp.eq.s32.totalorder %s29, 0
      %p71 = por %p69, %p70
      %p72 = scmp.ne.s32.totalorder %s60, %s61
      %p73 = scmp.eq.s32.totalorder %s30, 1
      %p74 = por %p72, %p73
      %p76 = scmp.ne.s32.totalorder %s61, %s75
      %p77 = scmp.eq.s32.totalorder %s30, 0
      %p78 = por %p76, %p77
      %s80 = sadd.s32 %s79, 1
      %p83 = scmp.eq.s32.totalorder %s24, 1
      %p84 = scmp.ne.s32.totalorder %s79, %s81
      %p85 = scmp.eq.s32.totalorder %s24, 0
      %p86 = por %p84, %p85
      %p87 = scmp.ne.s32.totalorder %s79, %s81
      %p88 = scmp.eq.s32.totalorder %s29, 1
      %p89 = por %p87, %p88
      %p90 = scmp.ne.s32.totalorder %s81, %s82
      %p91 = scmp.eq.s32.totalorder %s29, 0
      %p92 = por %p90, %p91
      %p93 = scmp.ne.s32.totalorder %s81, %s82
      %p94 = scmp.eq.s32.totalorder %s30, 1
      %p95 = por %p93, %p94
      %p97 = scmp.ne.s32.totalorder %s82, %s96
      %p98 = scmp.eq.s32.totalorder %s30, 0
      %p99 = por %p97, %p98
      %s101 = sadd.s32 %s100, 1
      %p104 = scmp.eq.s32.totalorder %s24, 1
      %p105 = scmp.ne.s32.totalorder %s100, %s102
      %p106 = scmp.eq.s32.totalorder %s24, 0
      %p107 = por %p105, %p106
      %p108 = scmp.ne.s32.totalorder %s100, %s102
      %p109 = scmp.eq.s32.totalorder %s29, 1
      %p110 = por %p108, %p109
      %p111 = scmp.ne.s32.totalorder %s102, %s103
      %p112 = scmp.eq.s32.totalorder %s29, 0
      %p113 = por %p111, %p112
      %p114 = scmp.ne.s32.totalorder %s102, %s103
      %p115 = scmp.eq.s32.totalorder %s30, 1
      %p116 = por %p114, %p115
      %p118 = scmp.ne.s32.totalorder %s103, %s117
      %p119 = scmp.eq.s32.totalorder %s30, 0
      %p120 = por %p118, %p119
      %s122 = sadd.s32 %s121, 1
      %p125 = scmp.eq.s32.totalorder %s24, 1
      %p126 = scmp.ne.s32.totalorder %s121, %s123
      %p127 = scmp.eq.s32.totalorder %s24, 0
      %p128 = por %p126, %p127
      %p129 = scmp.ne.s32.totalorder %s121, %s123
      %p130 = scmp.eq.s32.totalorder %s29, 1
      %p131 = por %p129, %p130
      %p132 = scmp.ne.s32.totalorder %s123, %s124
      %p133 = scmp.eq.s32.totalorder %s29, 0
      %p134 = por %p132, %p133
      %p135 = scmp.ne.s32.totalorder %s123, %s124
      %p136 = scmp.eq.s32.totalorder %s30, 1
      %p137 = por %p135, %p136
      %p139 = scmp.ne.s32.totalorder %s124, %s138
      %p140 = scmp.eq.s32.totalorder %s30, 0
      %p141 = por %p139, %p140
      %s143 = sadd.s32 %s142, 1
      %p146 = scmp.eq.s32.totalorder %s24, 1
      %p147 = scmp.ne.s32.totalorder %s142, %s144
      %p148 = scmp.eq.s32.totalorder %s24, 0
      %p149 = por %p147, %p148
      %p150 = scmp.ne.s32.totalorder %s142, %s144
      %p151 = scmp.eq.s32.totalorder %s29, 1
      %p152 = por %p150, %p151
      %p153 = scmp.ne.s32.totalorder %s144, %s145
      %p154 = scmp.eq.s32.totalorder %s29, 0
      %p155 = por %p153, %p154
      %p156 = scmp.ne.s32.totalorder %s144, %s145
      %p157 = scmp.eq.s32.totalorder %s30, 1
      %p158 = por %p156, %p157
      %p160 = scmp.ne.s32.totalorder %s145, %s159
      %p161 = scmp.eq.s32.totalorder %s30, 0
      %p162 = por %p160, %p161
      %s164 = sadd.s32 %s163, 1
      %p167 = scmp.eq.s32.totalorder %s24, 1
      %p168 = scmp.ne.s32.totalorder %s163, %s165
      %p169 = scmp.eq.s32.totalorder %s24, 0
      %p170 = por %p168, %p169
      %p171 = scmp.ne.s32.totalorder %s163, %s165
      %p172 = scmp.eq.s32.totalorder %s29, 1
      %p173 = por %p171, %p172
      %p174 = scmp.ne.s32.totalorder %s165, %s166
      %p175 = scmp.eq.s32.totalorder %s29, 0
      %p176 = por %p174, %p175
      %p177 = scmp.ne.s32.totalorder %s165, %s166
      %p178 = scmp.eq.s32.totalorder %s30, 1
      %p179 = por %p177, %p178
      %p181 = scmp.ne.s32.totalorder %s166, %s180
      %p182 = scmp.eq.s32.totalorder %s30, 0
      %p183 = por %p181, %p182
      %s185 = sadd.s32 %s184, 1
      %p188 = scmp.eq.s32.totalorder %s24, 1
      %p189 = scmp.ne.s32.totalorder %s184, %s186
      %p190 = scmp.eq.s32.totalorder %s24, 0
      %p191 = por %p189, %p190
      %p192 = scmp.ne.s32.totalorder %s184, %s186
      %p193 = scmp.eq.s32.totalorder %s29, 1
      %p194 = por %p192, %p193
      %p195 = scmp.ne.s32.totalorder %s186, %s187
      %p196 = scmp.eq.s32.totalorder %s29, 0
      %p197 = por %p195, %p196
      %p198 = scmp.ne.s32.totalorder %s186, %s187
      %p199 = scmp.eq.s32.totalorder %s30, 1
      %p200 = por %p198, %p199
      %p202 = scmp.ne.s32.totalorder %s187, %s201
      %p203 = scmp.eq.s32.totalorder %s30, 0
      %p204 = por %p202, %p203
      %s206 = sadd.s32 %s205, 1
      %p209 = scmp.eq.s32.totalorder %s24, 1
      %p210 = scmp.ne.s32.totalorder %s205, %s207
      %p211 = scmp.eq.s32.totalorder %s24, 0
      %p212 = por %p210, %p211
      %p213 = scmp.ne.s32.totalorder %s205, %s207
      %p214 = scmp.eq.s32.totalorder %s29, 1
      %p215 = por %p213, %p214
      %p216 = scmp.ne.s32.totalorder %s207, %s208
      %p217 = scmp.eq.s32.totalorder %s29, 0
      %p218 = por %p216, %p217
      %p219 = scmp.ne.s32.totalorder %s207, %s208
      %p220 = scmp.eq.s32.totalorder %s30, 1
      %p221 = por %p219, %p220
      %p223 = scmp.ne.s32.totalorder %s208, %s222
      %p224 = scmp.eq.s32.totalorder %s30, 0
      %p225 = por %p223, %p224
      %s227 = sadd.s32 %s226, 1
      %p230 = scmp.eq.s32.totalorder %s24, 1
      %p231 = scmp.ne.s32.totalorder %s226, %s228
      %p232 = scmp.eq.s32.totalorder %s24, 0
      %p233 = por %p231, %p232
      %p234 = scmp.ne.s32.totalorder %s226, %s228
      %p235 = scmp.eq.s32.totalorder %s29, 1
      %p236 = por %p234, %p235
      %p237 = scmp.ne.s32.totalorder %s228, %s229
      %p238 = scmp.eq.s32.totalorder %s29, 0
      %p239 = por %p237, %p238
      %p240 = scmp.ne.s32.totalorder %s228, %s229
      %p241 = scmp.eq.s32.totalorder %s30, 1
      %p242 = por %p240, %p241
      %p244 = scmp.ne.s32.totalorder %s229, %s243
      %p245 = scmp.eq.s32.totalorder %s30, 0
      %p246 = por %p244, %p245
      %s248 = sadd.s32 %s247, 1
      %p251 = scmp.eq.s32.totalorder %s24, 1
      %p252 = scmp.ne.s32.totalorder %s247, %s249
      %p253 = scmp.eq.s32.totalorder %s24, 0
      %p254 = por %p252, %p253
      %p255 = scmp.ne.s32.totalorder %s247, %s249
      %p256 = scmp.eq.s32.totalorder %s29, 1
      %p257 = por %p255, %p256
      %p258 = scmp.ne.s32.totalorder %s249, %s250
      %p259 = scmp.eq.s32.totalorder %s29, 0
      %p260 = por %p258, %p259
      %p261 = scmp.ne.s32.totalorder %s249, %s250
      %p262 = scmp.eq.s32.totalorder %s30, 1
      %p263 = por %p261, %p262
      %p265 = scmp.ne.s32.totalorder %s250, %s264
      %p266 = scmp.eq.s32.totalorder %s30, 0
      %p267 = por %p265, %p266
      %s268 = ssub.s32 %s24, %s31
      %p269 = scmp.eq.s32.totalorder %s268, 0
      %s271 = sadd.s32 %s270, 1
      %s272 = scalar_select %p269, %s270, %s271
      %p275 = pneg %p269
      %p276 = scmp.eq.s32.totalorder %s24, 1
      %p277 = por %p275, %p276
      %p278 = scmp.ne.s32.totalorder %s270, %s273
      %p279 = scmp.eq.s32.totalorder %s24, 0
      %p280 = por %p278, %p279
      %p281 = scmp.ne.s32.totalorder %s270, %s273
      %p282 = scmp.eq.s32.totalorder %s29, 1
      %p283 = por %p281, %p282
      %p284 = scmp.ne.s32.totalorder %s273, %s274
      %p285 = scmp.eq.s32.totalorder %s29, 0
      %p286 = por %p284, %p285
      %p287 = scmp.ne.s32.totalorder %s273, %s274
      %p288 = scmp.eq.s32.totalorder %s30, 1
      %p289 = por %p287, %p288
      %p291 = scmp.ne.s32.totalorder %s274, %s290
      %p292 = scmp.eq.s32.totalorder %s30, 0
      %p293 = por %p291, %p292
      %p294 = scmp.le.s32.totalorder 1, %s24
      %p295 = scmp.lt.s32.totalorder %s24, 3
      %p296 = pnand %p294, %p295
      %p297 = pneg %p296
      // Predicated region
      $region9: #{tpu_custom_call.1} parent=5 // pred_check
        _
      $region10: #{tpu_custom_call.1} parent=5 // pred_check_branch
        %299 = sbr.rel (%p296) target = $region12
      $region11: #{tpu_custom_call.1} parent=5 // pred_region
        %s300 = ssub.s32 %s24, 1
        // Predicated region
        $region13: #{tpu_custom_call.1} parent=11 // pred_check
          %p301 = pneg %p71
        $region14: #{tpu_custom_call.1} parent=11 // pred_check_branch
          %303 = sbr.rel (%p301) target = $region16
        $region15: #{tpu_custom_call.1} parent=11 // pred_region
          _
        $region16: #{tpu_custom_call.1} parent=11 // pred_fallthru
          _
        // Predicated region
        $region17: #{tpu_custom_call.1} parent=11 // pred_check
          %p304 = pneg %p92
        $region18: #{tpu_custom_call.1} parent=11 // pred_check_branch
          %306 = sbr.rel (%p304) target = $region20
        $region19: #{tpu_custom_call.1} parent=11 // pred_region
          _
        $region20: #{tpu_custom_call.1} parent=11 // pred_fallthru
          _
        // Predicated region
        $region21: #{tpu_custom_call.1} parent=11 // pred_check
          %p307 = pneg %p113
        $region22: #{tpu_custom_call.1} parent=11 // pred_check_branch
          %309 = sbr.rel (%p307) target = $region24
        $region23: #{tpu_custom_call.1} parent=11 // pred_region
          _
        $region24: #{tpu_custom_call.1} parent=11 // pred_fallthru
          _
        // Predicated region
        $region25: #{tpu_custom_call.1} parent=11 // pred_check
          %p310 = pneg %p134
        $region26: #{tpu_custom_call.1} parent=11 // pred_check_branch
          %312 = sbr.rel (%p310) target = $region28
        $region27: #{tpu_custom_call.1} parent=11 // pred_region
          _
        $region28: #{tpu_custom_call.1} parent=11 // pred_fallthru
          _
        // Predicated region
        $region29: #{tpu_custom_call.1} parent=11 // pred_check
          %p313 = pneg %p155
        $region30: #{tpu_custom_call.1} parent=11 // pred_check_branch
          %315 = sbr.rel (%p313) target = $region32
        $region31: #{tpu_custom_call.1} parent=11 // pred_region
          _
        $region32: #{tpu_custom_call.1} parent=11 // pred_fallthru
          _
        // Predicated region
        $region33: #{tpu_custom_call.1} parent=11 // pred_check
          %p316 = pneg %p176
        $region34: #{tpu_custom_call.1} parent=11 // pred_check_branch
          %318 = sbr.rel (%p316) target = $region36
        $region35: #{tpu_custom_call.1} parent=11 // pred_region
          _
        $region36: #{tpu_custom_call.1} parent=11 // pred_fallthru
          _
        // Predicated region
        $region37: #{tpu_custom_call.1} parent=11 // pred_check
          %p319 = pneg %p197
        $region38: #{tpu_custom_call.1} parent=11 // pred_check_branch
          %321 = sbr.rel (%p319) target = $region40
        $region39: #{tpu_custom_call.1} parent=11 // pred_region
          _
        $region40: #{tpu_custom_call.1} parent=11 // pred_fallthru
          _
        // Predicated region
        $region41: #{tpu_custom_call.1} parent=11 // pred_check
          %p322 = pneg %p218
        $region42: #{tpu_custom_call.1} parent=11 // pred_check_branch
          %324 = sbr.rel (%p322) target = $region44
        $region43: #{tpu_custom_call.1} parent=11 // pred_region
          %326 = vsyncadd [#allocation6], 0
          %s327 = sshll.u32 %s8, 4
          %s328 = int_to_ptr.hbm [resolvable:$true] %s327
          %s329 = sshll.u32 [#allocation5], 4
          %s330 = int_to_ptr.vmem [resolvable:$true] %s329
          %335 = dma.hbm_to_vmem [thread:$0]  %s328, 4096, %s330, [#allocation6], 128, 128, 8
        $region44: #{tpu_custom_call.1} parent=11 // pred_fallthru
          _
        // Predicated region
        $region45: #{tpu_custom_call.1} parent=11 // pred_check
          %p336 = pneg %p239
        $region46: #{tpu_custom_call.1} parent=11 // pred_check_branch
          %338 = sbr.rel (%p336) target = $region48
        $region47: #{tpu_custom_call.1} parent=11 // pred_region
          %340 = vsyncadd [#allocation6], 0
          %s341 = sshll.u32 %s9, 4
          %s342 = int_to_ptr.hbm [resolvable:$true] %s341
          %s343 = sshll.u32 [#allocation7], 4
          %s344 = int_to_ptr.vmem [resolvable:$true] %s343
          %349 = dma.hbm_to_vmem [thread:$0]  %s342, 20480, %s344, [#allocation6], 640, 640, 40
        $region48: #{tpu_custom_call.1} parent=11 // pred_fallthru
          _
        // Predicated region
        $region49: #{tpu_custom_call.1} parent=11 // pred_check
          %p350 = pneg %p260
        $region50: #{tpu_custom_call.1} parent=11 // pred_check_branch
          %352 = sbr.rel (%p350) target = $region52
        $region51: #{tpu_custom_call.1} parent=11 // pred_region
          _
        $region52: #{tpu_custom_call.1} parent=11 // pred_fallthru
          _
      $region12: #{tpu_custom_call.1} parent=5 // pred_fallthru
        _
      %p353 = scmp.lt.s32.totalorder %s24, 2
      // Predicated region
      $region53: #{tpu_custom_call.1} parent=5 // pred_check
        %p354 = pneg %p353
      $region54: #{tpu_custom_call.1} parent=5 // pred_check_branch
        %356 = sbr.rel (%p354) target = $region56
      $region55: #{tpu_custom_call.1} parent=5 // pred_region
        // Predicated region
        $region57: #{tpu_custom_call.1} parent=55 // pred_check
          %p357 = pneg %p44
        $region58: #{tpu_custom_call.1} parent=55 // pred_check_branch
          %359 = sbr.rel (%p357) target = $region60
        $region59: #{tpu_custom_call.1} parent=55 // pred_region
          %s360 = sand.u32 %s34, 1
          %s361 = scalar_lea.sflag [#allocation3], %s360
          %s362 = sand.u32 %s34, 1
          %s363 = smul.addr %s362, 64
          %s364 = scalar_lea.vmem [#allocation2], %s363
          %366 = vsyncadd %s361, 0
          %s367 = smul.addr %s24, 8
          %s368 = smul.addr %s367, 8
          %s369 = scalar_lea.hbm %s0, %s368
          %s370 = sshll.u32 %s369, 4
          %s371 = int_to_ptr.hbm [resolvable:$true] %s370
          %s372 = sshll.u32 %s364, 4
          %s373 = int_to_ptr.vmem [resolvable:$true] %s372
          %378 = dma.hbm_to_vmem [thread:$0]  %s371, 1024, %s373, %s361, 256, 256, 16
        $region60: #{tpu_custom_call.1} parent=55 // pred_fallthru
          _
      $region56: #{tpu_custom_call.1} parent=5 // pred_fallthru
        _
      %p379 = scmp.le.s32.totalorder 1, %s24
      %p380 = scmp.lt.s32.totalorder %s24, 3
      %p381 = pnand %p379, %p380
      %p382 = pneg %p381
      // Predicated region
      $region61: #{tpu_custom_call.1} parent=5 // pred_check
        _
      $region62: #{tpu_custom_call.1} parent=5 // pred_check_branch
        %384 = sbr.rel (%p381) target = $region64
      $region63: #{tpu_custom_call.1} parent=5 // pred_region
        %s385 = ssub.s32 %s24, 1
        %s386 = sand.u32 %s37, 1
        %s387 = scalar_lea.sflag [#allocation3], %s386
        %s388 = sand.u32 %s37, 1
        %s389 = smul.addr %s388, 64
        %s390 = scalar_lea.vmem [#allocation2], %s389
        // Predicated region
        $region65: #{tpu_custom_call.1} parent=63 // pred_check
          %p391 = pneg %p50
        $region66: #{tpu_custom_call.1} parent=63 // pred_check_branch
          %393 = sbr.rel (%p391) target = $region68
        $region67: #{tpu_custom_call.1} parent=63 // pred_region
          %395 = dma.done %s387, 1024
        $region68: #{tpu_custom_call.1} parent=63 // pred_fallthru
          _
        // Predicated region
        $region69: #{tpu_custom_call.1} parent=63 // pred_check
          %p396 = pneg %p218
        $region70: #{tpu_custom_call.1} parent=63 // pred_check_branch
          %398 = sbr.rel (%p396) target = $region72
        $region71: #{tpu_custom_call.1} parent=63 // pred_region
          %400 = dma.done [#allocation6], 4096
        $region72: #{tpu_custom_call.1} parent=63 // pred_fallthru
          _
        // Predicated region
        $region73: #{tpu_custom_call.1} parent=63 // pred_check
          %p401 = pneg %p239
        $region74: #{tpu_custom_call.1} parent=63 // pred_check_branch
          %403 = sbr.rel (%p401) target = $region76
        $region75: #{tpu_custom_call.1} parent=63 // pred_region
          %405 = dma.done [#allocation6], 20480
        $region76: #{tpu_custom_call.1} parent=63 // pred_fallthru
          _
        %s406 = sand.u32 %s37, 1
        %s407 = scalar_lea.sflag [#allocation3], %s406
        %s408 = sand.u32 %s37, 1
        %s409 = smul.addr %s408, 64
        %s410 = scalar_lea.vmem [#allocation2], %s409
        %p411 = pneg %p50
        %p412 = pneg %p47
        %p413 = pneg %p71
        %p414 = pneg %p68
        %p415 = pneg %p92
        %p416 = pneg %p89
        %p417 = pneg %p113
        %p418 = pneg %p110
        %p419 = pneg %p134
        %p420 = pneg %p131
        %p421 = pneg %p155
        %p422 = pneg %p152
        %p423 = pneg %p176
        %p424 = pneg %p173
        %p425 = pneg %p197
        %p426 = pneg %p194
        %p427 = pneg %p218
        %p428 = pneg %p215
        %p429 = pneg %p239
        %p430 = pneg %p236
        %p431 = pneg %p260
        %p432 = pneg %p257
        %p433 = pneg %p286
        %p434 = pneg %p283
        %s435 = sand.u32 %s273, 1
        %s436 = scalar_lea.sflag [#allocation4], %s435
        %s437 = sand.u32 %s273, 1
        %s438 = smul.addr %s437, 32
        %s439 = scalar_lea.vmem [#allocation8], %s438
        %v440 = vld [vmem:[%s390] sm:$0xff]
        %v441 = vld [vmem:[%s390 + $0x8] sm:$0xff]
        %v442 = vld [vmem:[%s390 + $0x10] sm:$0xff]
        %v443 = vld [vmem:[%s390 + $0x18] sm:$0xff]
        %v444 = vld [vmem:[%s390 + $0x20] sm:$0xff]
        %v445 = vld [vmem:[%s390 + $0x28] sm:$0xff]
        %v446 = vld [vmem:[%s390 + $0x30] sm:$0xff]
        %v447 = vld [vmem:[%s390 + $0x38] sm:$0xff]
        %v448 = vmax.f32 %v440, %v441
        %449 = vmax.xlane.f32.xlu0 %v448
        %v450 = vpop.xlane.xlu0 %449
        %v451 = vmax.f32 %v442, %v443
        %452 = vmax.xlane.f32.xlu0 %v451
        %v453 = vpop.xlane.xlu0 %452
        %v454 = vmax.f32 %v444, %v445
        %455 = vmax.xlane.f32.xlu0 %v454
        %v456 = vpop.xlane.xlu0 %455
        %v457 = vmax.f32 %v446, %v447
        %458 = vmax.xlane.f32.xlu0 %v457
        %v459 = vpop.xlane.xlu0 %458
        %v460 = vld [vmem:[%s1] sm:$0xff]
        %v461 = vld [vmem:[%s1 + $0x8] sm:$0xff]
        %v462 = vld [vmem:[%s1 + $0x10] sm:$0xff]
        %v463 = vld [vmem:[%s1 + $0x18] sm:$0xff]
        %v464 = vmul.f32 %v460, %v450
        %v465 = vmul.f32 %v461, %v453
        %v466 = vmul.f32 %v462, %v456
        %v467 = vmul.f32 %v463, %v459
        %vm468 = vcmask 64512
        %v469 = vsel %vm468, %v464, 0.0
        %v470 = vsel %vm468, %v465, 0.0
        %v471 = vadd.f32 %v469, %v470
        %v472 = vsel %vm468, %v466, 0.0
        %v473 = vadd.f32 %v471, %v472
        %v474 = vsel %vm468, %v467, 0.0
        %v475 = vadd.f32 %v473, %v474
        %v476 = vrot.slane %v475, 4
        %v477 = vadd.f32 %v475, %v476
        %v478 = vrot.slane %v477, 2
        %v479 = vadd.f32 %v477, %v478
        %v480 = vrot.slane %v479, 1
        %v481 = vadd.f32 %v479, %v480
        %v482 = vmax.f32 %v481, 0.0
        %v483 = vld [vmem:[%s2] sm:$0xff]
        %v484 = vld [vmem:[%s2 + $0x8] sm:$0xff]
        %v485 = vld [vmem:[%s2 + $0x10] sm:$0xff]
        %v486 = vld [vmem:[%s2 + $0x18] sm:$0xff]
        %v487 = vmul.f32 %v483, %v482
        %v488 = vmul.f32 %v484, %v482
        %v489 = vmul.f32 %v485, %v482
        %v490 = vmul.f32 %v486, %v482
        %v491 = vsel %vm468, %v487, 0.0
        %492 = vadd.xlane.f32.xlu0 %v491
        %v493 = vpop.xlane.xlu0 %492
        %v494 = vsel %vm468, %v488, 0.0
        %495 = vadd.xlane.f32.xlu0 %v494
        %v496 = vpop.xlane.xlu0 %495
        %v497 = vsel %vm468, %v489, 0.0
        %498 = vadd.xlane.f32.xlu0 %v497
        %v499 = vpop.xlane.xlu0 %498
        %v500 = vsel %vm468, %v490, 0.0
        %501 = vadd.xlane.f32.xlu0 %v500
        %v502 = vpop.xlane.xlu0 %501
        %v503 = vxor.u32 %v493, 2147483648
        %v504 = vxor.u32 %v496, 2147483648
        %v505 = vxor.u32 %v499, 2147483648
        %v506 = vxor.u32 %v502, 2147483648
        %v507 = vmul.f32 %v503, 1.442695
        %v508 = vpow.pop %v507
        %v509 = vmul.f32 %v504, 1.442695
        %v510 = vpow.pop %v509
        %v511 = vmul.f32 %v505, 1.442695
        %v512 = vpow.pop %v511
        %v513 = vmul.f32 %v506, 1.442695
        %v514 = vpow.pop %v513
        %v515 = vadd.f32 %v508, 1.0
        %v516 = vadd.f32 %v510, 1.0
        %v517 = vadd.f32 %v512, 1.0
        %v518 = vadd.f32 %v514, 1.0
        %v519 = vrcp.pop %v515
        %v520 = vmul.f32 %v515, %v519
        %v521 = vsub.f32 1.0, %v520
        %v522 = vmul.f32 %v519, %v521
        %v523 = vadd.f32 %v519, %v522
        %vm524 = vweird.f32 %v515
        %vm525 = vweird.f32 %v519
        %vm526 = vmor %vm524, %vm525
        %v527 = vsel %vm526, %v519, %v523
        %v528 = vand.u32 2147483647, %v515
        %vm529 = vcmp.eq.f32.partialorder %v528, 8.507059e+37
        %v530 = vand.u32 %v515, 2147483648
        %v531 = vor.u32 1.1754944e-38, %v530
        %v532 = vsel %vm529, %v531, %v527
        %v533 = vmul.f32 1.0, %v532
        %v534 = vrcp.pop %v516
        %v535 = vmul.f32 %v516, %v534
        %v536 = vsub.f32 1.0, %v535
        %v537 = vmul.f32 %v534, %v536
        %v538 = vadd.f32 %v534, %v537
        %vm539 = vweird.f32 %v516
        %vm540 = vweird.f32 %v534
        %vm541 = vmor %vm539, %vm540
        %v542 = vsel %vm541, %v534, %v538
        %v543 = vand.u32 2147483647, %v516
        %vm544 = vcmp.eq.f32.partialorder %v543, 8.507059e+37
        %v545 = vand.u32 %v516, 2147483648
        %v546 = vor.u32 1.1754944e-38, %v545
        %v547 = vsel %vm544, %v546, %v542
        %v548 = vmul.f32 1.0, %v547
        %v549 = vrcp.pop %v517
        %v550 = vmul.f32 %v517, %v549
        %v551 = vsub.f32 1.0, %v550
        %v552 = vmul.f32 %v549, %v551
        %v553 = vadd.f32 %v549, %v552
        %vm554 = vweird.f32 %v517
        %vm555 = vweird.f32 %v549
        %vm556 = vmor %vm554, %vm555
        %v557 = vsel %vm556, %v549, %v553
        %v558 = vand.u32 2147483647, %v517
        %vm559 = vcmp.eq.f32.partialorder %v558, 8.507059e+37
        %v560 = vand.u32 %v517, 2147483648
        %v561 = vor.u32 1.1754944e-38, %v560
        %v562 = vsel %vm559, %v561, %v557
        %v563 = vmul.f32 1.0, %v562
        %v564 = vrcp.pop %v518
        %v565 = vmul.f32 %v518, %v564
        %v566 = vsub.f32 1.0, %v565
        %v567 = vmul.f32 %v564, %v566
        %v568 = vadd.f32 %v564, %v567
        %vm569 = vweird.f32 %v518
        %vm570 = vweird.f32 %v564
        %vm571 = vmor %vm569, %vm570
        %v572 = vsel %vm571, %v564, %v568
        %v573 = vand.u32 2147483647, %v518
        %vm574 = vcmp.eq.f32.partialorder %v573, 8.507059e+37
        %v575 = vand.u32 %v518, 2147483648
        %v576 = vor.u32 1.1754944e-38, %v575
        %v577 = vsel %vm574, %v576, %v572
        %v578 = vmul.f32 1.0, %v577
        %v579 = vmul.f32 %v440, %v533
        %v580 = vmul.f32 %v441, %v533
        %v581 = vmul.f32 %v442, %v548
        %v582 = vmul.f32 %v443, %v548
        %v583 = vmul.f32 %v444, %v563
        %v584 = vmul.f32 %v445, %v563
        %v585 = vmul.f32 %v446, %v578
        %v586 = vmul.f32 %v447, %v578
        %v587 = vrot.slane %v579, 4
        %v588 = vmax.f32 %v579, %v587
        %v589 = vrot.slane %v588, 2
        %v590 = vmax.f32 %v588, %v589
        %v591 = vrot.slane %v590, 1
        %v592 = vmax.f32 %v590, %v591
        %v593 = vrot.slane %v580, 4
        %v594 = vmax.f32 %v580, %v593
        %v595 = vrot.slane %v594, 2
        %v596 = vmax.f32 %v594, %v595
        %v597 = vrot.slane %v596, 1
        %v598 = vmax.f32 %v596, %v597
        %v599 = vpack.c.bf16 %v592, %v592
        %v600 = vpack.c.bf16 %v598, %v598
        %v601 = vld [vmem:[#allocation5] sm:$0xff]
        %v602 = vld [vmem:[#allocation5 + $0x8] sm:$0xff]
        %v603 = vld [vmem:[#allocation5 + $0x10] sm:$0xff]
        %v604 = vld [vmem:[#allocation5 + $0x18] sm:$0xff]
        %v605 = vld [vmem:[#allocation5 + $0x20] sm:$0xff]
        %v606 = vld [vmem:[#allocation5 + $0x28] sm:$0xff]
        %v607 = vld [vmem:[#allocation5 + $0x30] sm:$0xff]
        %v608 = vld [vmem:[#allocation5 + $0x38] sm:$0xff]
        %v609 = vld [vmem:[#allocation5 + $0x40] sm:$0xff]
        %v610 = vld [vmem:[#allocation5 + $0x48] sm:$0xff]
        %v611 = vld [vmem:[#allocation5 + $0x50] sm:$0xff]
        %v612 = vld [vmem:[#allocation5 + $0x58] sm:$0xff]
        %v613 = vld [vmem:[#allocation5 + $0x60] sm:$0xff]
        %v614 = vld [vmem:[#allocation5 + $0x68] sm:$0xff]
        %v615 = vld [vmem:[#allocation5 + $0x70] sm:$0xff]
        %v616 = vld [vmem:[#allocation5 + $0x78] sm:$0xff]
        %v617 = vld [vmem:[#allocation5 + $0x80] sm:$0xff]
        %v618 = vld [vmem:[#allocation5 + $0x88] sm:$0xff]
        %v619 = vld [vmem:[#allocation5 + $0x90] sm:$0xff]
        %v620 = vld [vmem:[#allocation5 + $0x98] sm:$0xff]
        %v621 = vld [vmem:[#allocation5 + $0xa0] sm:$0xff]
        %v622 = vld [vmem:[#allocation5 + $0xa8] sm:$0xff]
        %v623 = vld [vmem:[#allocation5 + $0xb0] sm:$0xff]
        %v624 = vld [vmem:[#allocation5 + $0xb8] sm:$0xff]
        %v625 = vld [vmem:[#allocation5 + $0xc0] sm:$0xff]
        %v626 = vld [vmem:[#allocation5 + $0xc8] sm:$0xff]
        %v627 = vld [vmem:[#allocation5 + $0xd0] sm:$0xff]
        %v628 = vld [vmem:[#allocation5 + $0xd8] sm:$0xff]
        %v629 = vld [vmem:[#allocation5 + $0xe0] sm:$0xff]
        %v630 = vld [vmem:[#allocation5 + $0xe8] sm:$0xff]
        %v631 = vld [vmem:[#allocation5 + $0xf0] sm:$0xff]
        %v632 = vld [vmem:[#allocation5 + $0xf8] sm:$0xff]
        %v665 = vunpack.c.l.b16 %v601
        %v666 = vunpack.c.h.b16 %v601
        %v667 = vunpack.c.l.b16 %v602
        %v668 = vunpack.c.h.b16 %v602
        %v669 = vunpack.c.l.b16 %v603
        %v670 = vunpack.c.h.b16 %v603
        %v671 = vunpack.c.l.b16 %v604
        %v672 = vunpack.c.h.b16 %v604
        %v673 = vunpack.c.l.b16 %v605
        %v674 = vunpack.c.h.b16 %v605
        %v675 = vunpack.c.l.b16 %v606
        %v676 = vunpack.c.h.b16 %v606
        %v677 = vunpack.c.l.b16 %v607
        %v678 = vunpack.c.h.b16 %v607
        %v679 = vunpack.c.l.b16 %v608
        %v680 = vunpack.c.h.b16 %v608
        %v681 = vunpack.c.l.b16 %v609
        %v682 = vunpack.c.h.b16 %v609
        %v683 = vunpack.c.l.b16 %v610
        %v684 = vunpack.c.h.b16 %v610
        %v685 = vunpack.c.l.b16 %v611
        %v686 = vunpack.c.h.b16 %v611
        %v687 = vunpack.c.l.b16 %v612
        %v688 = vunpack.c.h.b16 %v612
        %v689 = vunpack.c.l.b16 %v613
        %v690 = vunpack.c.h.b16 %v613
        %v691 = vunpack.c.l.b16 %v614
        %v692 = vunpack.c.h.b16 %v614
        %v693 = vunpack.c.l.b16 %v615
        %v694 = vunpack.c.h.b16 %v615
        %v695 = vunpack.c.l.b16 %v616
        %v696 = vunpack.c.h.b16 %v616
        %v697 = vunpack.c.l.b16 %v617
        %v698 = vunpack.c.h.b16 %v617
        %v699 = vunpack.c.l.b16 %v618
        %v700 = vunpack.c.h.b16 %v618
        %v701 = vunpack.c.l.b16 %v619
        %v702 = vunpack.c.h.b16 %v619
        %v703 = vunpack.c.l.b16 %v620
        %v704 = vunpack.c.h.b16 %v620
        %v705 = vunpack.c.l.b16 %v621
        %v706 = vunpack.c.h.b16 %v621
        %v707 = vunpack.c.l.b16 %v622
        %v708 = vunpack.c.h.b16 %v622
        %v709 = vunpack.c.l.b16 %v623
        %v710 = vunpack.c.h.b16 %v623
        %v711 = vunpack.c.l.b16 %v624
        %v712 = vunpack.c.h.b16 %v624
        %v713 = vunpack.c.l.b16 %v625
        %v714 = vunpack.c.h.b16 %v625
        %v715 = vunpack.c.l.b16 %v626
        %v716 = vunpack.c.h.b16 %v626
        %v717 = vunpack.c.l.b16 %v627
        %v718 = vunpack.c.h.b16 %v627
        %v719 = vunpack.c.l.b16 %v628
        %v720 = vunpack.c.h.b16 %v628
        %v721 = vunpack.c.l.b16 %v629
        %v722 = vunpack.c.h.b16 %v629
        %v723 = vunpack.c.l.b16 %v630
        %v724 = vunpack.c.h.b16 %v630
        %v725 = vunpack.c.l.b16 %v631
        %v726 = vunpack.c.h.b16 %v631
        %v727 = vunpack.c.l.b16 %v632
        %v728 = vunpack.c.h.b16 %v632
        %v729 = vpack.c.b16 %v667, %v665
        %v730 = vpack.c.b16 %v668, %v666
        %v731 = vpack.c.b16 %v671, %v669
        %v732 = vpack.c.b16 %v672, %v670
        %v733 = vpack.c.b16 %v675, %v673
        %v734 = vpack.c.b16 %v676, %v674
        %v735 = vpack.c.b16 %v679, %v677
        %v736 = vpack.c.b16 %v680, %v678
        %v737 = vpack.c.b16 %v683, %v681
        %v738 = vpack.c.b16 %v684, %v682
        %v739 = vpack.c.b16 %v687, %v685
        %v740 = vpack.c.b16 %v688, %v686
        %v741 = vpack.c.b16 %v691, %v689
        %v742 = vpack.c.b16 %v692, %v690
        %v743 = vpack.c.b16 %v695, %v693
        %v744 = vpack.c.b16 %v696, %v694
        %v745 = vpack.c.b16 %v699, %v697
        %v746 = vpack.c.b16 %v700, %v698
        %v747 = vpack.c.b16 %v703, %v701
        %v748 = vpack.c.b16 %v704, %v702
        %v749 = vpack.c.b16 %v707, %v705
        %v750 = vpack.c.b16 %v708, %v706
        %v751 = vpack.c.b16 %v711, %v709
        %v752 = vpack.c.b16 %v712, %v710
        %v753 = vpack.c.b16 %v715, %v713
        %v754 = vpack.c.b16 %v716, %v714
        %v755 = vpack.c.b16 %v719, %v717
        %v756 = vpack.c.b16 %v720, %v718
        %v757 = vpack.c.b16 %v723, %v721
        %v758 = vpack.c.b16 %v724, %v722
        %v759 = vpack.c.b16 %v727, %v725
        %v760 = vpack.c.b16 %v728, %v726
        %793 = vmatpush.bf16.msra.mxu0 %v743
        %794 = vmatpush.bf16.msra.mxu0 %v741
        %795 = vmatpush.bf16.msra.mxu0 %v739
        %796 = vmatpush.bf16.msra.mxu0 %v737
        %797 = vmatpush.bf16.msra.mxu0 %v735
        %798 = vmatpush.bf16.msra.mxu0 %v733
        %799 = vmatpush.bf16.msra.mxu0 %v731
        %800 = vmatpush.bf16.msra.mxu0 %v729
        %801 = vmatmul.bf16.gmra.mxu0 %v599
        %v802 = vpop.f32.mrf.mxu0
        %v803 = vadd.f32 0.0, %v802
        %v804 = vpop.f32.mrf.mxu0
        %805 = vdwg.mxu0
        %806 = vmatpush.bf16.msra.mxu0 %v759
        %807 = vmatpush.bf16.msra.mxu0 %v757
        %808 = vmatpush.bf16.msra.mxu0 %v755
        %809 = vmatpush.bf16.msra.mxu0 %v753
        %810 = vmatpush.bf16.msra.mxu0 %v751
        %811 = vmatpush.bf16.msra.mxu0 %v749
        %812 = vmatpush.bf16.msra.mxu0 %v747
        %813 = vmatpush.bf16.msra.mxu0 %v745
        %814 = vmatmul.bf16.gmra.mxu0 %v600
        %v815 = vpop.f32.mrf.mxu0
        %v816 = vadd.f32 %v803, %v815
        %v817 = vpop.f32.mrf.mxu0
        %818 = vdwg.mxu0
        %819 = vmatpush.bf16.msra.mxu0 %v744
        %820 = vmatpush.bf16.msra.mxu0 %v742
        %821 = vmatpush.bf16.msra.mxu0 %v740
        %822 = vmatpush.bf16.msra.mxu0 %v738
        %823 = vmatpush.bf16.msra.mxu0 %v736
        %824 = vmatpush.bf16.msra.mxu0 %v734
        %825 = vmatpush.bf16.msra.mxu0 %v732
        %826 = vmatpush.bf16.msra.mxu0 %v730
        %827 = vmatmul.bf16.gmra.mxu0 %v599
        %v828 = vpop.f32.mrf.mxu0
        %v829 = vadd.f32 0.0, %v828
        %v830 = vpop.f32.mrf.mxu0
        %831 = vdwg.mxu0
        %832 = vmatpush.bf16.msra.mxu0 %v760
        %833 = vmatpush.bf16.msra.mxu0 %v758
        %834 = vmatpush.bf16.msra.mxu0 %v756
        %835 = vmatpush.bf16.msra.mxu0 %v754
        %836 = vmatpush.bf16.msra.mxu0 %v752
        %837 = vmatpush.bf16.msra.mxu0 %v750
        %838 = vmatpush.bf16.msra.mxu0 %v748
        %839 = vmatpush.bf16.msra.mxu0 %v746
        %840 = vmatmul.bf16.gmra.mxu0 %v600
        %v841 = vpop.f32.mrf.mxu0
        %v842 = vadd.f32 %v829, %v841
        %v843 = vpop.f32.mrf.mxu0
        %844 = vdwg.mxu0
        %v845 = vxor.u32 %v816, 2147483648
        %v846 = vxor.u32 %v842, 2147483648
        %v847 = vmul.f32 %v845, 1.442695
        %v848 = vpow.pop %v847
        %v849 = vmul.f32 %v846, 1.442695
        %v850 = vpow.pop %v849
        %v851 = vadd.f32 %v848, 1.0
        %v852 = vadd.f32 %v850, 1.0
        %v853 = vrcp.pop %v851
        %v854 = vmul.f32 %v851, %v853
        %v855 = vsub.f32 1.0, %v854
        %v856 = vmul.f32 %v853, %v855
        %v857 = vadd.f32 %v853, %v856
        %vm858 = vweird.f32 %v851
        %vm859 = vweird.f32 %v853
        %vm860 = vmor %vm858, %vm859
        %v861 = vsel %vm860, %v853, %v857
        %v862 = vand.u32 2147483647, %v851
        %vm863 = vcmp.eq.f32.partialorder %v862, 8.507059e+37
        %v864 = vand.u32 %v851, 2147483648
        %v865 = vor.u32 1.1754944e-38, %v864
        %v866 = vsel %vm863, %v865, %v861
        %v867 = vmul.f32 1.0, %v866
        %v868 = vrcp.pop %v852
        %v869 = vmul.f32 %v852, %v868
        %v870 = vsub.f32 1.0, %v869
        %v871 = vmul.f32 %v868, %v870
        %v872 = vadd.f32 %v868, %v871
        %vm873 = vweird.f32 %v852
        %vm874 = vweird.f32 %v868
        %vm875 = vmor %vm873, %vm874
        %v876 = vsel %vm875, %v868, %v872
        %v877 = vand.u32 2147483647, %v852
        %vm878 = vcmp.eq.f32.partialorder %v877, 8.507059e+37
        %v879 = vand.u32 %v852, 2147483648
        %v880 = vor.u32 1.1754944e-38, %v879
        %v881 = vsel %vm878, %v880, %v876
        %v882 = vmul.f32 1.0, %v881
        %v883 = vpack.c.bf16 %v867, %v867
        %v884 = vpack.c.bf16 %v882, %v882
        %v885 = vld [vmem:[#allocation7] sm:$0xff]
        %v886 = vld [vmem:[#allocation7 + $0x8] sm:$0xff]
        %v887 = vld [vmem:[#allocation7 + $0x10] sm:$0xff]
        %v888 = vld [vmem:[#allocation7 + $0x18] sm:$0xff]
        %v889 = vld [vmem:[#allocation7 + $0x20] sm:$0xff]
        %v890 = vld [vmem:[#allocation7 + $0x28] sm:$0xff]
        %v891 = vld [vmem:[#allocation7 + $0x30] sm:$0xff]
        %v892 = vld [vmem:[#allocation7 + $0x38] sm:$0xff]
        %v893 = vld [vmem:[#allocation7 + $0x40] sm:$0xff]
        %v894 = vld [vmem:[#allocation7 + $0x48] sm:$0xff]
        %v895 = vld [vmem:[#allocation7 + $0x50] sm:$0xff]
        %v896 = vld [vmem:[#allocation7 + $0x58] sm:$0xff]
        %v897 = vld [vmem:[#allocation7 + $0x60] sm:$0xff]
        %v898 = vld [vmem:[#allocation7 + $0x68] sm:$0xff]
        %v899 = vld [vmem:[#allocation7 + $0x70] sm:$0xff]
        %v900 = vld [vmem:[#allocation7 + $0x78] sm:$0xff]
        %v901 = vld [vmem:[#allocation7 + $0x80] sm:$0xff]
        %v902 = vld [vmem:[#allocation7 + $0x88] sm:$0xff]
        %v903 = vld [vmem:[#allocation7 + $0x90] sm:$0xff]
        %v904 = vld [vmem:[#allocation7 + $0x98] sm:$0xff]
        %v905 = vld [vmem:[#allocation7 + $0xa0] sm:$0xff]
        %v906 = vld [vmem:[#allocation7 + $0xa8] sm:$0xff]
        %v907 = vld [vmem:[#allocation7 + $0xb0] sm:$0xff]
        %v908 = vld [vmem:[#allocation7 + $0xb8] sm:$0xff]
        %v909 = vld [vmem:[#allocation7 + $0xc0] sm:$0xff]
        %v910 = vld [vmem:[#allocation7 + $0xc8] sm:$0xff]
        %v911 = vld [vmem:[#allocation7 + $0xd0] sm:$0xff]
        %v912 = vld [vmem:[#allocation7 + $0xd8] sm:$0xff]
        %v913 = vld [vmem:[#allocation7 + $0xe0] sm:$0xff]
        %v914 = vld [vmem:[#allocation7 + $0xe8] sm:$0xff]
        %v915 = vld [vmem:[#allocation7 + $0xf0] sm:$0xff]
        %v916 = vld [vmem:[#allocation7 + $0xf8] sm:$0xff]
        %v917 = vld [vmem:[#allocation7 + $0x100] sm:$0xff]
        %v918 = vld [vmem:[#allocation7 + $0x108] sm:$0xff]
        %v919 = vld [vmem:[#allocation7 + $0x110] sm:$0xff]
        %v920 = vld [vmem:[#allocation7 + $0x118] sm:$0xff]
        %v921 = vld [vmem:[#allocation7 + $0x120] sm:$0xff]
        %v922 = vld [vmem:[#allocation7 + $0x128] sm:$0xff]
        %v923 = vld [vmem:[#allocation7 + $0x130] sm:$0xff]
        %v924 = vld [vmem:[#allocation7 + $0x138] sm:$0xff]
        %v925 = vld [vmem:[#allocation7 + $0x140] sm:$0xff]
        %v926 = vld [vmem:[#allocation7 + $0x148] sm:$0xff]
        %v927 = vld [vmem:[#allocation7 + $0x150] sm:$0xff]
        %v928 = vld [vmem:[#allocation7 + $0x158] sm:$0xff]
        %v929 = vld [vmem:[#allocation7 + $0x160] sm:$0xff]
        %v930 = vld [vmem:[#allocation7 + $0x168] sm:$0xff]
        %v931 = vld [vmem:[#allocation7 + $0x170] sm:$0xff]
        %v932 = vld [vmem:[#allocation7 + $0x178] sm:$0xff]
        %v933 = vld [vmem:[#allocation7 + $0x180] sm:$0xff]
        %v934 = vld [vmem:[#allocation7 + $0x188] sm:$0xff]
        %v935 = vld [vmem:[#allocation7 + $0x190] sm:$0xff]
        %v936 = vld [vmem:[#allocation7 + $0x198] sm:$0xff]
        %v937 = vld [vmem:[#allocation7 + $0x1a0] sm:$0xff]
        %v938 = vld [vmem:[#allocation7 + $0x1a8] sm:$0xff]
        %v939 = vld [vmem:[#allocation7 + $0x1b0] sm:$0xff]
        %v940 = vld [vmem:[#allocation7 + $0x1b8] sm:$0xff]
        %v941 = vld [vmem:[#allocation7 + $0x1c0] sm:$0xff]
        %v942 = vld [vmem:[#allocation7 + $0x1c8] sm:$0xff]
        %v943 = vld [vmem:[#allocation7 + $0x1d0] sm:$0xff]
        %v944 = vld [vmem:[#allocation7 + $0x1d8] sm:$0xff]
        %v945 = vld [vmem:[#allocation7 + $0x1e0] sm:$0xff]
        %v946 = vld [vmem:[#allocation7 + $0x1e8] sm:$0xff]
        %v947 = vld [vmem:[#allocation7 + $0x1f0] sm:$0xff]
        %v948 = vld [vmem:[#allocation7 + $0x1f8] sm:$0xff]
        %v949 = vld [vmem:[#allocation7 + $0x200] sm:$0xff]
        %v950 = vld [vmem:[#allocation7 + $0x208] sm:$0xff]
        %v951 = vld [vmem:[#allocation7 + $0x210] sm:$0xff]
        %v952 = vld [vmem:[#allocation7 + $0x218] sm:$0xff]
        %v953 = vld [vmem:[#allocation7 + $0x220] sm:$0xff]
        %v954 = vld [vmem:[#allocation7 + $0x228] sm:$0xff]
        %v955 = vld [vmem:[#allocation7 + $0x230] sm:$0xff]
        %v956 = vld [vmem:[#allocation7 + $0x238] sm:$0xff]
        %v957 = vld [vmem:[#allocation7 + $0x240] sm:$0xff]
        %v958 = vld [vmem:[#allocation7 + $0x248] sm:$0xff]
        %v959 = vld [vmem:[#allocation7 + $0x250] sm:$0xff]
        %v960 = vld [vmem:[#allocation7 + $0x258] sm:$0xff]
        %v961 = vld [vmem:[#allocation7 + $0x260] sm:$0xff]
        %v962 = vld [vmem:[#allocation7 + $0x268] sm:$0xff]
        %v963 = vld [vmem:[#allocation7 + $0x270] sm:$0xff]
        %v964 = vld [vmem:[#allocation7 + $0x278] sm:$0xff]
        %v965 = vld [vmem:[#allocation7 + $0x280] sm:$0xff]
        %v966 = vld [vmem:[#allocation7 + $0x288] sm:$0xff]
        %v967 = vld [vmem:[#allocation7 + $0x290] sm:$0xff]
        %v968 = vld [vmem:[#allocation7 + $0x298] sm:$0xff]
        %v969 = vld [vmem:[#allocation7 + $0x2a0] sm:$0xff]
        %v970 = vld [vmem:[#allocation7 + $0x2a8] sm:$0xff]
        %v971 = vld [vmem:[#allocation7 + $0x2b0] sm:$0xff]
        %v972 = vld [vmem:[#allocation7 + $0x2b8] sm:$0xff]
        %v973 = vld [vmem:[#allocation7 + $0x2c0] sm:$0xff]
        %v974 = vld [vmem:[#allocation7 + $0x2c8] sm:$0xff]
        %v975 = vld [vmem:[#allocation7 + $0x2d0] sm:$0xff]
        %v976 = vld [vmem:[#allocation7 + $0x2d8] sm:$0xff]
        %v977 = vld [vmem:[#allocation7 + $0x2e0] sm:$0xff]
        %v978 = vld [vmem:[#allocation7 + $0x2e8] sm:$0xff]
        %v979 = vld [vmem:[#allocation7 + $0x2f0] sm:$0xff]
        %v980 = vld [vmem:[#allocation7 + $0x2f8] sm:$0xff]
        %v981 = vld [vmem:[#allocation7 + $0x300] sm:$0xff]
        %v982 = vld [vmem:[#allocation7 + $0x308] sm:$0xff]
        %v983 = vld [vmem:[#allocation7 + $0x310] sm:$0xff]
        %v984 = vld [vmem:[#allocation7 + $0x318] sm:$0xff]
        %v985 = vld [vmem:[#allocation7 + $0x320] sm:$0xff]
        %v986 = vld [vmem:[#allocation7 + $0x328] sm:$0xff]
        %v987 = vld [vmem:[#allocation7 + $0x330] sm:$0xff]
        %v988 = vld [vmem:[#allocation7 + $0x338] sm:$0xff]
        %v989 = vld [vmem:[#allocation7 + $0x340] sm:$0xff]
        %v990 = vld [vmem:[#allocation7 + $0x348] sm:$0xff]
        %v991 = vld [vmem:[#allocation7 + $0x350] sm:$0xff]
        %v992 = vld [vmem:[#allocation7 + $0x358] sm:$0xff]
        %v993 = vld [vmem:[#allocation7 + $0x360] sm:$0xff]
        %v994 = vld [vmem:[#allocation7 + $0x368] sm:$0xff]
        %v995 = vld [vmem:[#allocation7 + $0x370] sm:$0xff]
        %v996 = vld [vmem:[#allocation7 + $0x378] sm:$0xff]
        %v997 = vld [vmem:[#allocation7 + $0x380] sm:$0xff]
        %v998 = vld [vmem:[#allocation7 + $0x388] sm:$0xff]
        %v999 = vld [vmem:[#allocation7 + $0x390] sm:$0xff]
        %v1000 = vld [vmem:[#allocation7 + $0x398] sm:$0xff]
        %v1001 = vld [vmem:[#allocation7 + $0x3a0] sm:$0xff]
        %v1002 = vld [vmem:[#allocation7 + $0x3a8] sm:$0xff]
        %v1003 = vld [vmem:[#allocation7 + $0x3b0] sm:$0xff]
        %v1004 = vld [vmem:[#allocation7 + $0x3b8] sm:$0xff]
        %v1005 = vld [vmem:[#allocation7 + $0x3c0] sm:$0xff]
        %v1006 = vld [vmem:[#allocation7 + $0x3c8] sm:$0xff]
        %v1007 = vld [vmem:[#allocation7 + $0x3d0] sm:$0xff]
        %v1008 = vld [vmem:[#allocation7 + $0x3d8] sm:$0xff]
        %v1009 = vld [vmem:[#allocation7 + $0x3e0] sm:$0xff]
        %v1010 = vld [vmem:[#allocation7 + $0x3e8] sm:$0xff]
        %v1011 = vld [vmem:[#allocation7 + $0x3f0] sm:$0xff]
        %v1012 = vld [vmem:[#allocation7 + $0x3f8] sm:$0xff]
        %v1013 = vld [vmem:[#allocation7 + $0x400] sm:$0xff]
        %v1014 = vld [vmem:[#allocation7 + $0x408] sm:$0xff]
        %v1015 = vld [vmem:[#allocation7 + $0x410] sm:$0xff]
        %v1016 = vld [vmem:[#allocation7 + $0x418] sm:$0xff]
        %v1017 = vld [vmem:[#allocation7 + $0x420] sm:$0xff]
        %v1018 = vld [vmem:[#allocation7 + $0x428] sm:$0xff]
        %v1019 = vld [vmem:[#allocation7 + $0x430] sm:$0xff]
        %v1020 = vld [vmem:[#allocation7 + $0x438] sm:$0xff]
        %v1021 = vld [vmem:[#allocation7 + $0x440] sm:$0xff]
        %v1022 = vld [vmem:[#allocation7 + $0x448] sm:$0xff]
        %v1023 = vld [vmem:[#allocation7 + $0x450] sm:$0xff]
        %v1024 = vld [vmem:[#allocation7 + $0x458] sm:$0xff]
        %v1025 = vld [vmem:[#allocation7 + $0x460] sm:$0xff]
        %v1026 = vld [vmem:[#allocation7 + $0x468] sm:$0xff]
        %v1027 = vld [vmem:[#allocation7 + $0x470] sm:$0xff]
        %v1028 = vld [vmem:[#allocation7 + $0x478] sm:$0xff]
        %v1029 = vld [vmem:[#allocation7 + $0x480] sm:$0xff]
        %v1030 = vld [vmem:[#allocation7 + $0x488] sm:$0xff]
        %v1031 = vld [vmem:[#allocation7 + $0x490] sm:$0xff]
        %v1032 = vld [vmem:[#allocation7 + $0x498] sm:$0xff]
        %v1033 = vld [vmem:[#allocation7 + $0x4a0] sm:$0xff]
        %v1034 = vld [vmem:[#allocation7 + $0x4a8] sm:$0xff]
        %v1035 = vld [vmem:[#allocation7 + $0x4b0] sm:$0xff]
        %v1036 = vld [vmem:[#allocation7 + $0x4b8] sm:$0xff]
        %v1037 = vld [vmem:[#allocation7 + $0x4c0] sm:$0xff]
        %v1038 = vld [vmem:[#allocation7 + $0x4c8] sm:$0xff]
        %v1039 = vld [vmem:[#allocation7 + $0x4d0] sm:$0xff]
        %v1040 = vld [vmem:[#allocation7 + $0x4d8] sm:$0xff]
        %v1041 = vld [vmem:[#allocation7 + $0x4e0] sm:$0xff]
        %v1042 = vld [vmem:[#allocation7 + $0x4e8] sm:$0xff]
        %v1043 = vld [vmem:[#allocation7 + $0x4f0] sm:$0xff]
        %v1044 = vld [vmem:[#allocation7 + $0x4f8] sm:$0xff]
        %v1045 = vld [vmem:[%s10] sm:$0xff]
        %v1046 = vld [vmem:[%s10 + $0x8] sm:$0x3]
        %v1207 = vunpack.c.l.b16 %v885
        %v1208 = vunpack.c.h.b16 %v885
        %v1209 = vunpack.c.l.b16 %v886
        %v1210 = vunpack.c.h.b16 %v886
        %v1211 = vunpack.c.l.b16 %v887
        %v1212 = vunpack.c.h.b16 %v887
        %v1213 = vunpack.c.l.b16 %v888
        %v1214 = vunpack.c.h.b16 %v888
        %v1215 = vunpack.c.l.b16 %v889
        %v1216 = vunpack.c.h.b16 %v889
        %v1217 = vunpack.c.l.b16 %v890
        %v1218 = vunpack.c.h.b16 %v890
        %v1219 = vunpack.c.l.b16 %v891
        %v1220 = vunpack.c.h.b16 %v891
        %v1221 = vunpack.c.l.b16 %v892
        %v1222 = vunpack.c.h.b16 %v892
        %v1223 = vunpack.c.l.b16 %v893
        %v1224 = vunpack.c.h.b16 %v893
        %v1225 = vunpack.c.l.b16 %v894
        %v1226 = vunpack.c.h.b16 %v894
        %v1227 = vunpack.c.l.b16 %v895
        %v1228 = vunpack.c.h.b16 %v895
        %v1229 = vunpack.c.l.b16 %v896
        %v1230 = vunpack.c.h.b16 %v896
        %v1231 = vunpack.c.l.b16 %v897
        %v1232 = vunpack.c.h.b16 %v897
        %v1233 = vunpack.c.l.b16 %v898
        %v1234 = vunpack.c.h.b16 %v898
        %v1235 = vunpack.c.l.b16 %v899
        %v1236 = vunpack.c.h.b16 %v899
        %v1237 = vunpack.c.l.b16 %v900
        %v1238 = vunpack.c.h.b16 %v900
        %v1239 = vunpack.c.l.b16 %v901
        %v1240 = vunpack.c.h.b16 %v901
        %v1241 = vunpack.c.l.b16 %v902
        %v1242 = vunpack.c.h.b16 %v902
        %v1243 = vunpack.c.l.b16 %v903
        %v1244 = vunpack.c.h.b16 %v903
        %v1245 = vunpack.c.l.b16 %v904
        %v1246 = vunpack.c.h.b16 %v904
        %v1247 = vunpack.c.l.b16 %v905
        %v1248 = vunpack.c.h.b16 %v905
        %v1249 = vunpack.c.l.b16 %v906
        %v1250 = vunpack.c.h.b16 %v906
        %v1251 = vunpack.c.l.b16 %v907
        %v1252 = vunpack.c.h.b16 %v907
        %v1253 = vunpack.c.l.b16 %v908
        %v1254 = vunpack.c.h.b16 %v908
        %v1255 = vunpack.c.l.b16 %v909
        %v1256 = vunpack.c.h.b16 %v909
        %v1257 = vunpack.c.l.b16 %v910
        %v1258 = vunpack.c.h.b16 %v910
        %v1259 = vunpack.c.l.b16 %v911
        %v1260 = vunpack.c.h.b16 %v911
        %v1261 = vunpack.c.l.b16 %v912
        %v1262 = vunpack.c.h.b16 %v912
        %v1263 = vunpack.c.l.b16 %v913
        %v1264 = vunpack.c.h.b16 %v913
        %v1265 = vunpack.c.l.b16 %v914
        %v1266 = vunpack.c.h.b16 %v914
        %v1267 = vunpack.c.l.b16 %v915
        %v1268 = vunpack.c.h.b16 %v915
        %v1269 = vunpack.c.l.b16 %v916
        %v1270 = vunpack.c.h.b16 %v916
        %v1271 = vunpack.c.l.b16 %v917
        %v1272 = vunpack.c.h.b16 %v917
        %v1273 = vunpack.c.l.b16 %v918
        %v1274 = vunpack.c.h.b16 %v918
        %v1275 = vunpack.c.l.b16 %v919
        %v1276 = vunpack.c.h.b16 %v919
        %v1277 = vunpack.c.l.b16 %v920
        %v1278 = vunpack.c.h.b16 %v920
        %v1279 = vunpack.c.l.b16 %v921
        %v1280 = vunpack.c.h.b16 %v921
        %v1281 = vunpack.c.l.b16 %v922
        %v1282 = vunpack.c.h.b16 %v922
        %v1283 = vunpack.c.l.b16 %v923
        %v1284 = vunpack.c.h.b16 %v923
        %v1285 = vunpack.c.l.b16 %v924
        %v1286 = vunpack.c.h.b16 %v924
        %v1287 = vunpack.c.l.b16 %v925
        %v1288 = vunpack.c.h.b16 %v925
        %v1289 = vunpack.c.l.b16 %v926
        %v1290 = vunpack.c.h.b16 %v926
        %v1291 = vunpack.c.l.b16 %v927
        %v1292 = vunpack.c.h.b16 %v927
        %v1293 = vunpack.c.l.b16 %v928
        %v1294 = vunpack.c.h.b16 %v928
        %v1295 = vunpack.c.l.b16 %v929
        %v1296 = vunpack.c.h.b16 %v929
        %v1297 = vunpack.c.l.b16 %v930
        %v1298 = vunpack.c.h.b16 %v930
        %v1299 = vunpack.c.l.b16 %v931
        %v1300 = vunpack.c.h.b16 %v931
        %v1301 = vunpack.c.l.b16 %v932
        %v1302 = vunpack.c.h.b16 %v932
        %v1303 = vunpack.c.l.b16 %v933
        %v1304 = vunpack.c.h.b16 %v933
        %v1305 = vunpack.c.l.b16 %v934
        %v1306 = vunpack.c.h.b16 %v934
        %v1307 = vunpack.c.l.b16 %v935
        %v1308 = vunpack.c.h.b16 %v935
        %v1309 = vunpack.c.l.b16 %v936
        %v1310 = vunpack.c.h.b16 %v936
        %v1311 = vunpack.c.l.b16 %v937
        %v1312 = vunpack.c.h.b16 %v937
        %v1313 = vunpack.c.l.b16 %v938
        %v1314 = vunpack.c.h.b16 %v938
        %v1315 = vunpack.c.l.b16 %v939
        %v1316 = vunpack.c.h.b16 %v939
        %v1317 = vunpack.c.l.b16 %v940
        %v1318 = vunpack.c.h.b16 %v940
        %v1319 = vunpack.c.l.b16 %v941
        %v1320 = vunpack.c.h.b16 %v941
        %v1321 = vunpack.c.l.b16 %v942
        %v1322 = vunpack.c.h.b16 %v942
        %v1323 = vunpack.c.l.b16 %v943
        %v1324 = vunpack.c.h.b16 %v943
        %v1325 = vunpack.c.l.b16 %v944
        %v1326 = vunpack.c.h.b16 %v944
        %v1327 = vunpack.c.l.b16 %v945
        %v1328 = vunpack.c.h.b16 %v945
        %v1329 = vunpack.c.l.b16 %v946
        %v1330 = vunpack.c.h.b16 %v946
        %v1331 = vunpack.c.l.b16 %v947
        %v1332 = vunpack.c.h.b16 %v947
        %v1333 = vunpack.c.l.b16 %v948
        %v1334 = vunpack.c.h.b16 %v948
        %v1335 = vunpack.c.l.b16 %v949
        %v1336 = vunpack.c.h.b16 %v949
        %v1337 = vunpack.c.l.b16 %v950
        %v1338 = vunpack.c.h.b16 %v950
        %v1339 = vunpack.c.l.b16 %v951
        %v1340 = vunpack.c.h.b16 %v951
        %v1341 = vunpack.c.l.b16 %v952
        %v1342 = vunpack.c.h.b16 %v952
        %v1343 = vunpack.c.l.b16 %v953
        %v1344 = vunpack.c.h.b16 %v953
        %v1345 = vunpack.c.l.b16 %v954
        %v1346 = vunpack.c.h.b16 %v954
        %v1347 = vunpack.c.l.b16 %v955
        %v1348 = vunpack.c.h.b16 %v955
        %v1349 = vunpack.c.l.b16 %v956
        %v1350 = vunpack.c.h.b16 %v956
        %v1351 = vunpack.c.l.b16 %v957
        %v1352 = vunpack.c.h.b16 %v957
        %v1353 = vunpack.c.l.b16 %v958
        %v1354 = vunpack.c.h.b16 %v958
        %v1355 = vunpack.c.l.b16 %v959
        %v1356 = vunpack.c.h.b16 %v959
        %v1357 = vunpack.c.l.b16 %v960
        %v1358 = vunpack.c.h.b16 %v960
        %v1359 = vunpack.c.l.b16 %v961
        %v1360 = vunpack.c.h.b16 %v961
        %v1361 = vunpack.c.l.b16 %v962
        %v1362 = vunpack.c.h.b16 %v962
        %v1363 = vunpack.c.l.b16 %v963
        %v1364 = vunpack.c.h.b16 %v963
        %v1365 = vunpack.c.l.b16 %v964
        %v1366 = vunpack.c.h.b16 %v964
        %v1367 = vunpack.c.l.b16 %v965
        %v1368 = vunpack.c.h.b16 %v965
        %v1369 = vunpack.c.l.b16 %v966
        %v1370 = vunpack.c.h.b16 %v966
        %v1371 = vunpack.c.l.b16 %v967
        %v1372 = vunpack.c.h.b16 %v967
        %v1373 = vunpack.c.l.b16 %v968
        %v1374 = vunpack.c.h.b16 %v968
        %v1375 = vunpack.c.l.b16 %v969
        %v1376 = vunpack.c.h.b16 %v969
        %v1377 = vunpack.c.l.b16 %v970
        %v1378 = vunpack.c.h.b16 %v970
        %v1379 = vunpack.c.l.b16 %v971
        %v1380 = vunpack.c.h.b16 %v971
        %v1381 = vunpack.c.l.b16 %v972
        %v1382 = vunpack.c.h.b16 %v972
        %v1383 = vunpack.c.l.b16 %v973
        %v1384 = vunpack.c.h.b16 %v973
        %v1385 = vunpack.c.l.b16 %v974
        %v1386 = vunpack.c.h.b16 %v974
        %v1387 = vunpack.c.l.b16 %v975
        %v1388 = vunpack.c.h.b16 %v975
        %v1389 = vunpack.c.l.b16 %v976
        %v1390 = vunpack.c.h.b16 %v976
        %v1391 = vunpack.c.l.b16 %v977
        %v1392 = vunpack.c.h.b16 %v977
        %v1393 = vunpack.c.l.b16 %v978
        %v1394 = vunpack.c.h.b16 %v978
        %v1395 = vunpack.c.l.b16 %v979
        %v1396 = vunpack.c.h.b16 %v979
        %v1397 = vunpack.c.l.b16 %v980
        %v1398 = vunpack.c.h.b16 %v980
        %v1399 = vunpack.c.l.b16 %v981
        %v1400 = vunpack.c.h.b16 %v981
        %v1401 = vunpack.c.l.b16 %v982
        %v1402 = vunpack.c.h.b16 %v982
        %v1403 = vunpack.c.l.b16 %v983
        %v1404 = vunpack.c.h.b16 %v983
        %v1405 = vunpack.c.l.b16 %v984
        %v1406 = vunpack.c.h.b16 %v984
        %v1407 = vunpack.c.l.b16 %v985
        %v1408 = vunpack.c.h.b16 %v985
        %v1409 = vunpack.c.l.b16 %v986
        %v1410 = vunpack.c.h.b16 %v986
        %v1411 = vunpack.c.l.b16 %v987
        %v1412 = vunpack.c.h.b16 %v987
        %v1413 = vunpack.c.l.b16 %v988
        %v1414 = vunpack.c.h.b16 %v988
        %v1415 = vunpack.c.l.b16 %v989
        %v1416 = vunpack.c.h.b16 %v989
        %v1417 = vunpack.c.l.b16 %v990
        %v1418 = vunpack.c.h.b16 %v990
        %v1419 = vunpack.c.l.b16 %v991
        %v1420 = vunpack.c.h.b16 %v991
        %v1421 = vunpack.c.l.b16 %v992
        %v1422 = vunpack.c.h.b16 %v992
        %v1423 = vunpack.c.l.b16 %v993
        %v1424 = vunpack.c.h.b16 %v993
        %v1425 = vunpack.c.l.b16 %v994
        %v1426 = vunpack.c.h.b16 %v994
        %v1427 = vunpack.c.l.b16 %v995
        %v1428 = vunpack.c.h.b16 %v995
        %v1429 = vunpack.c.l.b16 %v996
        %v1430 = vunpack.c.h.b16 %v996
        %v1431 = vunpack.c.l.b16 %v997
        %v1432 = vunpack.c.h.b16 %v997
        %v1433 = vunpack.c.l.b16 %v998
        %v1434 = vunpack.c.h.b16 %v998
        %v1435 = vunpack.c.l.b16 %v999
        %v1436 = vunpack.c.h.b16 %v999
        %v1437 = vunpack.c.l.b16 %v1000
        %v1438 = vunpack.c.h.b16 %v1000
        %v1439 = vunpack.c.l.b16 %v1001
        %v1440 = vunpack.c.h.b16 %v1001
        %v1441 = vunpack.c.l.b16 %v1002
        %v1442 = vunpack.c.h.b16 %v1002
        %v1443 = vunpack.c.l.b16 %v1003
        %v1444 = vunpack.c.h.b16 %v1003
        %v1445 = vunpack.c.l.b16 %v1004
        %v1446 = vunpack.c.h.b16 %v1004
        %v1447 = vunpack.c.l.b16 %v1005
        %v1448 = vunpack.c.h.b16 %v1005
        %v1449 = vunpack.c.l.b16 %v1006
        %v1450 = vunpack.c.h.b16 %v1006
        %v1451 = vunpack.c.l.b16 %v1007
        %v1452 = vunpack.c.h.b16 %v1007
        %v1453 = vunpack.c.l.b16 %v1008
        %v1454 = vunpack.c.h.b16 %v1008
        %v1455 = vunpack.c.l.b16 %v1009
        %v1456 = vunpack.c.h.b16 %v1009
        %v1457 = vunpack.c.l.b16 %v1010
        %v1458 = vunpack.c.h.b16 %v1010
        %v1459 = vunpack.c.l.b16 %v1011
        %v1460 = vunpack.c.h.b16 %v1011
        %v1461 = vunpack.c.l.b16 %v1012
        %v1462 = vunpack.c.h.b16 %v1012
        %v1463 = vunpack.c.l.b16 %v1013
        %v1464 = vunpack.c.h.b16 %v1013
        %v1465 = vunpack.c.l.b16 %v1014
        %v1466 = vunpack.c.h.b16 %v1014
        %v1467 = vunpack.c.l.b16 %v1015
        %v1468 = vunpack.c.h.b16 %v1015
        %v1469 = vunpack.c.l.b16 %v1016
        %v1470 = vunpack.c.h.b16 %v1016
        %v1471 = vunpack.c.l.b16 %v1017
        %v1472 = vunpack.c.h.b16 %v1017
        %v1473 = vunpack.c.l.b16 %v1018
        %v1474 = vunpack.c.h.b16 %v1018
        %v1475 = vunpack.c.l.b16 %v1019
        %v1476 = vunpack.c.h.b16 %v1019
        %v1477 = vunpack.c.l.b16 %v1020
        %v1478 = vunpack.c.h.b16 %v1020
        %v1479 = vunpack.c.l.b16 %v1021
        %v1480 = vunpack.c.h.b16 %v1021
        %v1481 = vunpack.c.l.b16 %v1022
        %v1482 = vunpack.c.h.b16 %v1022
        %v1483 = vunpack.c.l.b16 %v1023
        %v1484 = vunpack.c.h.b16 %v1023
        %v1485 = vunpack.c.l.b16 %v1024
        %v1486 = vunpack.c.h.b16 %v1024
        %v1487 = vunpack.c.l.b16 %v1025
        %v1488 = vunpack.c.h.b16 %v1025
        %v1489 = vunpack.c.l.b16 %v1026
        %v1490 = vunpack.c.h.b16 %v1026
        %v1491 = vunpack.c.l.b16 %v1027
        %v1492 = vunpack.c.h.b16 %v1027
        %v1493 = vunpack.c.l.b16 %v1028
        %v1494 = vunpack.c.h.b16 %v1028
        %v1495 = vunpack.c.l.b16 %v1029
        %v1496 = vunpack.c.h.b16 %v1029
        %v1497 = vunpack.c.l.b16 %v1030
        %v1498 = vunpack.c.h.b16 %v1030
        %v1499 = vunpack.c.l.b16 %v1031
        %v1500 = vunpack.c.h.b16 %v1031
        %v1501 = vunpack.c.l.b16 %v1032
        %v1502 = vunpack.c.h.b16 %v1032
        %v1503 = vunpack.c.l.b16 %v1033
        %v1504 = vunpack.c.h.b16 %v1033
        %v1505 = vunpack.c.l.b16 %v1034
        %v1506 = vunpack.c.h.b16 %v1034
        %v1507 = vunpack.c.l.b16 %v1035
        %v1508 = vunpack.c.h.b16 %v1035
        %v1509 = vunpack.c.l.b16 %v1036
        %v1510 = vunpack.c.h.b16 %v1036
        %v1511 = vunpack.c.l.b16 %v1037
        %v1512 = vunpack.c.h.b16 %v1037
        %v1513 = vunpack.c.l.b16 %v1038
        %v1514 = vunpack.c.h.b16 %v1038
        %v1515 = vunpack.c.l.b16 %v1039
        %v1516 = vunpack.c.h.b16 %v1039
        %v1517 = vunpack.c.l.b16 %v1040
        %v1518 = vunpack.c.h.b16 %v1040
        %v1519 = vunpack.c.l.b16 %v1041
        %v1520 = vunpack.c.h.b16 %v1041
        %v1521 = vunpack.c.l.b16 %v1042
        %v1522 = vunpack.c.h.b16 %v1042
        %v1523 = vunpack.c.l.b16 %v1043
        %v1524 = vunpack.c.h.b16 %v1043
        %v1525 = vunpack.c.l.b16 %v1044
        %v1526 = vunpack.c.h.b16 %v1044
        %v1527 = vpack.c.b16 %v1217, %v1207
        %v1528 = vpack.c.b16 %v1218, %v1208
        %v1529 = vpack.c.b16 %v1219, %v1209
        %v1530 = vpack.c.b16 %v1220, %v1210
        %v1531 = vpack.c.b16 %v1221, %v1211
        %v1532 = vpack.c.b16 %v1222, %v1212
        %v1533 = vpack.c.b16 %v1223, %v1213
        %v1534 = vpack.c.b16 %v1224, %v1214
        %v1535 = vpack.c.b16 %v1225, %v1215
        %v1536 = vpack.c.b16 %v1226, %v1216
        %v1537 = vpack.c.b16 %v1237, %v1227
        %v1538 = vpack.c.b16 %v1238, %v1228
        %v1539 = vpack.c.b16 %v1239, %v1229
        %v1540 = vpack.c.b16 %v1240, %v1230
        %v1541 = vpack.c.b16 %v1241, %v1231
        %v1542 = vpack.c.b16 %v1242, %v1232
        %v1543 = vpack.c.b16 %v1243, %v1233
        %v1544 = vpack.c.b16 %v1244, %v1234
        %v1545 = vpack.c.b16 %v1245, %v1235
        %v1546 = vpack.c.b16 %v1246, %v1236
        %v1547 = vpack.c.b16 %v1257, %v1247
        %v1548 = vpack.c.b16 %v1258, %v1248
        %v1549 = vpack.c.b16 %v1259, %v1249
        %v1550 = vpack.c.b16 %v1260, %v1250
        %v1551 = vpack.c.b16 %v1261, %v1251
        %v1552 = vpack.c.b16 %v1262, %v1252
        %v1553 = vpack.c.b16 %v1263, %v1253
        %v1554 = vpack.c.b16 %v1264, %v1254
        %v1555 = vpack.c.b16 %v1265, %v1255
        %v1556 = vpack.c.b16 %v1266, %v1256
        %v1557 = vpack.c.b16 %v1277, %v1267
        %v1558 = vpack.c.b16 %v1278, %v1268
        %v1559 = vpack.c.b16 %v1279, %v1269
        %v1560 = vpack.c.b16 %v1280, %v1270
        %v1561 = vpack.c.b16 %v1281, %v1271
        %v1562 = vpack.c.b16 %v1282, %v1272
        %v1563 = vpack.c.b16 %v1283, %v1273
        %v1564 = vpack.c.b16 %v1284, %v1274
        %v1565 = vpack.c.b16 %v1285, %v1275
        %v1566 = vpack.c.b16 %v1286, %v1276
        %v1567 = vpack.c.b16 %v1297, %v1287
        %v1568 = vpack.c.b16 %v1298, %v1288
        %v1569 = vpack.c.b16 %v1299, %v1289
        %v1570 = vpack.c.b16 %v1300, %v1290
        %v1571 = vpack.c.b16 %v1301, %v1291
        %v1572 = vpack.c.b16 %v1302, %v1292
        %v1573 = vpack.c.b16 %v1303, %v1293
        %v1574 = vpack.c.b16 %v1304, %v1294
        %v1575 = vpack.c.b16 %v1305, %v1295
        %v1576 = vpack.c.b16 %v1306, %v1296
        %v1577 = vpack.c.b16 %v1317, %v1307
        %v1578 = vpack.c.b16 %v1318, %v1308
        %v1579 = vpack.c.b16 %v1319, %v1309
        %v1580 = vpack.c.b16 %v1320, %v1310
        %v1581 = vpack.c.b16 %v1321, %v1311
        %v1582 = vpack.c.b16 %v1322, %v1312
        %v1583 = vpack.c.b16 %v1323, %v1313
        %v1584 = vpack.c.b16 %v1324, %v1314
        %v1585 = vpack.c.b16 %v1325, %v1315
        %v1586 = vpack.c.b16 %v1326, %v1316
        %v1587 = vpack.c.b16 %v1337, %v1327
        %v1588 = vpack.c.b16 %v1338, %v1328
        %v1589 = vpack.c.b16 %v1339, %v1329
        %v1590 = vpack.c.b16 %v1340, %v1330
        %v1591 = vpack.c.b16 %v1341, %v1331
        %v1592 = vpack.c.b16 %v1342, %v1332
        %v1593 = vpack.c.b16 %v1343, %v1333
        %v1594 = vpack.c.b16 %v1344, %v1334
        %v1595 = vpack.c.b16 %v1345, %v1335
        %v1596 = vpack.c.b16 %v1346, %v1336
        %v1597 = vpack.c.b16 %v1357, %v1347
        %v1598 = vpack.c.b16 %v1358, %v1348
        %v1599 = vpack.c.b16 %v1359, %v1349
        %v1600 = vpack.c.b16 %v1360, %v1350
        %v1601 = vpack.c.b16 %v1361, %v1351
        %v1602 = vpack.c.b16 %v1362, %v1352
        %v1603 = vpack.c.b16 %v1363, %v1353
        %v1604 = vpack.c.b16 %v1364, %v1354
        %v1605 = vpack.c.b16 %v1365, %v1355
        %v1606 = vpack.c.b16 %v1366, %v1356
        %v1607 = vpack.c.b16 %v1377, %v1367
        %v1608 = vpack.c.b16 %v1378, %v1368
        %v1609 = vpack.c.b16 %v1379, %v1369
        %v1610 = vpack.c.b16 %v1380, %v1370
        %v1611 = vpack.c.b16 %v1381, %v1371
        %v1612 = vpack.c.b16 %v1382, %v1372
        %v1613 = vpack.c.b16 %v1383, %v1373
        %v1614 = vpack.c.b16 %v1384, %v1374
        %v1615 = vpack.c.b16 %v1385, %v1375
        %v1616 = vpack.c.b16 %v1386, %v1376
        %v1617 = vpack.c.b16 %v1397, %v1387
        %v1618 = vpack.c.b16 %v1398, %v1388
        %v1619 = vpack.c.b16 %v1399, %v1389
        %v1620 = vpack.c.b16 %v1400, %v1390
        %v1621 = vpack.c.b16 %v1401, %v1391
        %v1622 = vpack.c.b16 %v1402, %v1392
        %v1623 = vpack.c.b16 %v1403, %v1393
        %v1624 = vpack.c.b16 %v1404, %v1394
        %v1625 = vpack.c.b16 %v1405, %v1395
        %v1626 = vpack.c.b16 %v1406, %v1396
        %v1627 = vpack.c.b16 %v1417, %v1407
        %v1628 = vpack.c.b16 %v1418, %v1408
        %v1629 = vpack.c.b16 %v1419, %v1409
        %v1630 = vpack.c.b16 %v1420, %v1410
        %v1631 = vpack.c.b16 %v1421, %v1411
        %v1632 = vpack.c.b16 %v1422, %v1412
        %v1633 = vpack.c.b16 %v1423, %v1413
        %v1634 = vpack.c.b16 %v1424, %v1414
        %v1635 = vpack.c.b16 %v1425, %v1415
        %v1636 = vpack.c.b16 %v1426, %v1416
        %v1637 = vpack.c.b16 %v1437, %v1427
        %v1638 = vpack.c.b16 %v1438, %v1428
        %v1639 = vpack.c.b16 %v1439, %v1429
        %v1640 = vpack.c.b16 %v1440, %v1430
        %v1641 = vpack.c.b16 %v1441, %v1431
        %v1642 = vpack.c.b16 %v1442, %v1432
        %v1643 = vpack.c.b16 %v1443, %v1433
        %v1644 = vpack.c.b16 %v1444, %v1434
        %v1645 = vpack.c.b16 %v1445, %v1435
        %v1646 = vpack.c.b16 %v1446, %v1436
        %v1647 = vpack.c.b16 %v1457, %v1447
        %v1648 = vpack.c.b16 %v1458, %v1448
        %v1649 = vpack.c.b16 %v1459, %v1449
        %v1650 = vpack.c.b16 %v1460, %v1450
        %v1651 = vpack.c.b16 %v1461, %v1451
        %v1652 = vpack.c.b16 %v1462, %v1452
        %v1653 = vpack.c.b16 %v1463, %v1453
        %v1654 = vpack.c.b16 %v1464, %v1454
        %v1655 = vpack.c.b16 %v1465, %v1455
        %v1656 = vpack.c.b16 %v1466, %v1456
        %v1657 = vpack.c.b16 %v1477, %v1467
        %v1658 = vpack.c.b16 %v1478, %v1468
        %v1659 = vpack.c.b16 %v1479, %v1469
        %v1660 = vpack.c.b16 %v1480, %v1470
        %v1661 = vpack.c.b16 %v1481, %v1471
        %v1662 = vpack.c.b16 %v1482, %v1472
        %v1663 = vpack.c.b16 %v1483, %v1473
        %v1664 = vpack.c.b16 %v1484, %v1474
        %v1665 = vpack.c.b16 %v1485, %v1475
        %v1666 = vpack.c.b16 %v1486, %v1476
        %v1667 = vpack.c.b16 %v1497, %v1487
        %v1668 = vpack.c.b16 %v1498, %v1488
        %v1669 = vpack.c.b16 %v1499, %v1489
        %v1670 = vpack.c.b16 %v1500, %v1490
        %v1671 = vpack.c.b16 %v1501, %v1491
        %v1672 = vpack.c.b16 %v1502, %v1492
        %v1673 = vpack.c.b16 %v1503, %v1493
        %v1674 = vpack.c.b16 %v1504, %v1494
        %v1675 = vpack.c.b16 %v1505, %v1495
        %v1676 = vpack.c.b16 %v1506, %v1496
        %v1677 = vpack.c.b16 %v1517, %v1507
        %v1678 = vpack.c.b16 %v1518, %v1508
        %v1679 = vpack.c.b16 %v1519, %v1509
        %v1680 = vpack.c.b16 %v1520, %v1510
        %v1681 = vpack.c.b16 %v1521, %v1511
        %v1682 = vpack.c.b16 %v1522, %v1512
        %v1683 = vpack.c.b16 %v1523, %v1513
        %v1684 = vpack.c.b16 %v1524, %v1514
        %v1685 = vpack.c.b16 %v1525, %v1515
        %v1686 = vpack.c.b16 %v1526, %v1516
        %v1849 = vperm.slane %v1045, 0
        %v1850 = vperm.slane %v1045, 1
        %v1851 = vperm.slane %v1045, 2
        %v1852 = vperm.slane %v1045, 3
        %v1853 = vperm.slane %v1045, 4
        %v1854 = vperm.slane %v1045, 5
        %v1855 = vperm.slane %v1045, 6
        %v1856 = vperm.slane %v1045, 7
        %v1857 = vperm.slane %v1046, 0
        %v1858 = vperm.slane %v1046, 1
        %1869 = vmatpush.bf16.msra.mxu0 %v1597
        %1870 = vmatpush.bf16.msra.mxu0 %v1587
        %1871 = vmatpush.bf16.msra.mxu0 %v1577
        %1872 = vmatpush.bf16.msra.mxu0 %v1567
        %1873 = vmatpush.bf16.msra.mxu0 %v1557
        %1874 = vmatpush.bf16.msra.mxu0 %v1547
        %1875 = vmatpush.bf16.msra.mxu0 %v1537
        %1876 = vmatpush.bf16.msra.mxu0 %v1527
        %1877 = vmatmul.bf16.gmra.mxu0 %v883
        %v1878 = vpop.f32.mrf.mxu0
        %v1879 = vadd.f32 %v1849, %v1878
        %v1880 = vpop.f32.mrf.mxu0
        %1881 = vdwg.mxu0
        %1882 = vmatpush.bf16.msra.mxu0 %v1677
        %1883 = vmatpush.bf16.msra.mxu0 %v1667
        %1884 = vmatpush.bf16.msra.mxu0 %v1657
        %1885 = vmatpush.bf16.msra.mxu0 %v1647
        %1886 = vmatpush.bf16.msra.mxu0 %v1637
        %1887 = vmatpush.bf16.msra.mxu0 %v1627
        %1888 = vmatpush.bf16.msra.mxu0 %v1617
        %1889 = vmatpush.bf16.msra.mxu0 %v1607
        %1890 = vmatmul.bf16.gmra.mxu0 %v884
        %v1891 = vpop.f32.mrf.mxu0
        %v1892 = vadd.f32 %v1879, %v1891
        %v1893 = vpop.f32.mrf.mxu0
        %1894 = vdwg.mxu0
        %1895 = vmatpush.bf16.msra.mxu0 %v1598
        %1896 = vmatpush.bf16.msra.mxu0 %v1588
        %1897 = vmatpush.bf16.msra.mxu0 %v1578
        %1898 = vmatpush.bf16.msra.mxu0 %v1568
        %1899 = vmatpush.bf16.msra.mxu0 %v1558
        %1900 = vmatpush.bf16.msra.mxu0 %v1548
        %1901 = vmatpush.bf16.msra.mxu0 %v1538
        %1902 = vmatpush.bf16.msra.mxu0 %v1528
        %1903 = vmatmul.bf16.gmra.mxu0 %v883
        %v1904 = vpop.f32.mrf.mxu0
        %v1905 = vadd.f32 %v1850, %v1904
        %v1906 = vpop.f32.mrf.mxu0
        %1907 = vdwg.mxu0
        %1908 = vmatpush.bf16.msra.mxu0 %v1678
        %1909 = vmatpush.bf16.msra.mxu0 %v1668
        %1910 = vmatpush.bf16.msra.mxu0 %v1658
        %1911 = vmatpush.bf16.msra.mxu0 %v1648
        %1912 = vmatpush.bf16.msra.mxu0 %v1638
        %1913 = vmatpush.bf16.msra.mxu0 %v1628
        %1914 = vmatpush.bf16.msra.mxu0 %v1618
        %1915 = vmatpush.bf16.msra.mxu0 %v1608
        %1916 = vmatmul.bf16.gmra.mxu0 %v884
        %v1917 = vpop.f32.mrf.mxu0
        %v1918 = vadd.f32 %v1905, %v1917
        %v1919 = vpop.f32.mrf.mxu0
        %1920 = vdwg.mxu0
        %1921 = vmatpush.bf16.msra.mxu0 %v1599
        %1922 = vmatpush.bf16.msra.mxu0 %v1589
        %1923 = vmatpush.bf16.msra.mxu0 %v1579
        %1924 = vmatpush.bf16.msra.mxu0 %v1569
        %1925 = vmatpush.bf16.msra.mxu0 %v1559
        %1926 = vmatpush.bf16.msra.mxu0 %v1549
        %1927 = vmatpush.bf16.msra.mxu0 %v1539
        %1928 = vmatpush.bf16.msra.mxu0 %v1529
        %1929 = vmatmul.bf16.gmra.mxu0 %v883
        %v1930 = vpop.f32.mrf.mxu0
        %v1931 = vadd.f32 %v1851, %v1930
        %v1932 = vpop.f32.mrf.mxu0
        %1933 = vdwg.mxu0
        %1934 = vmatpush.bf16.msra.mxu0 %v1679
        %1935 = vmatpush.bf16.msra.mxu0 %v1669
        %1936 = vmatpush.bf16.msra.mxu0 %v1659
        %1937 = vmatpush.bf16.msra.mxu0 %v1649
        %1938 = vmatpush.bf16.msra.mxu0 %v1639
        %1939 = vmatpush.bf16.msra.mxu0 %v1629
        %1940 = vmatpush.bf16.msra.mxu0 %v1619
        %1941 = vmatpush.bf16.msra.mxu0 %v1609
        %1942 = vmatmul.bf16.gmra.mxu0 %v884
        %v1943 = vpop.f32.mrf.mxu0
        %v1944 = vadd.f32 %v1931, %v1943
        %v1945 = vpop.f32.mrf.mxu0
        %1946 = vdwg.mxu0
        %1947 = vmatpush.bf16.msra.mxu0 %v1600
        %1948 = vmatpush.bf16.msra.mxu0 %v1590
        %1949 = vmatpush.bf16.msra.mxu0 %v1580
        %1950 = vmatpush.bf16.msra.mxu0 %v1570
        %1951 = vmatpush.bf16.msra.mxu0 %v1560
        %1952 = vmatpush.bf16.msra.mxu0 %v1550
        %1953 = vmatpush.bf16.msra.mxu0 %v1540
        %1954 = vmatpush.bf16.msra.mxu0 %v1530
        %1955 = vmatmul.bf16.gmra.mxu0 %v883
        %v1956 = vpop.f32.mrf.mxu0
        %v1957 = vadd.f32 %v1852, %v1956
        %v1958 = vpop.f32.mrf.mxu0
        %1959 = vdwg.mxu0
        %1960 = vmatpush.bf16.msra.mxu0 %v1680
        %1961 = vmatpush.bf16.msra.mxu0 %v1670
        %1962 = vmatpush.bf16.msra.mxu0 %v1660
        %1963 = vmatpush.bf16.msra.mxu0 %v1650
        %1964 = vmatpush.bf16.msra.mxu0 %v1640
        %1965 = vmatpush.bf16.msra.mxu0 %v1630
        %1966 = vmatpush.bf16.msra.mxu0 %v1620
        %1967 = vmatpush.bf16.msra.mxu0 %v1610
        %1968 = vmatmul.bf16.gmra.mxu0 %v884
        %v1969 = vpop.f32.mrf.mxu0
        %v1970 = vadd.f32 %v1957, %v1969
        %v1971 = vpop.f32.mrf.mxu0
        %1972 = vdwg.mxu0
        %1973 = vmatpush.bf16.msra.mxu0 %v1601
        %1974 = vmatpush.bf16.msra.mxu0 %v1591
        %1975 = vmatpush.bf16.msra.mxu0 %v1581
        %1976 = vmatpush.bf16.msra.mxu0 %v1571
        %1977 = vmatpush.bf16.msra.mxu0 %v1561
        %1978 = vmatpush.bf16.msra.mxu0 %v1551
        %1979 = vmatpush.bf16.msra.mxu0 %v1541
        %1980 = vmatpush.bf16.msra.mxu0 %v1531
        %1981 = vmatmul.bf16.gmra.mxu0 %v883
        %v1982 = vpop.f32.mrf.mxu0
        %v1983 = vadd.f32 %v1853, %v1982
        %v1984 = vpop.f32.mrf.mxu0
        %1985 = vdwg.mxu0
        %1986 = vmatpush.bf16.msra.mxu0 %v1681
        %1987 = vmatpush.bf16.msra.mxu0 %v1671
        %1988 = vmatpush.bf16.msra.mxu0 %v1661
        %1989 = vmatpush.bf16.msra.mxu0 %v1651
        %1990 = vmatpush.bf16.msra.mxu0 %v1641
        %1991 = vmatpush.bf16.msra.mxu0 %v1631
        %1992 = vmatpush.bf16.msra.mxu0 %v1621
        %1993 = vmatpush.bf16.msra.mxu0 %v1611
        %1994 = vmatmul.bf16.gmra.mxu0 %v884
        %v1995 = vpop.f32.mrf.mxu0
        %v1996 = vadd.f32 %v1983, %v1995
        %v1997 = vpop.f32.mrf.mxu0
        %1998 = vdwg.mxu0
        %1999 = vmatpush.bf16.msra.mxu0 %v1602
        %2000 = vmatpush.bf16.msra.mxu0 %v1592
        %2001 = vmatpush.bf16.msra.mxu0 %v1582
        %2002 = vmatpush.bf16.msra.mxu0 %v1572
        %2003 = vmatpush.bf16.msra.mxu0 %v1562
        %2004 = vmatpush.bf16.msra.mxu0 %v1552
        %2005 = vmatpush.bf16.msra.mxu0 %v1542
        %2006 = vmatpush.bf16.msra.mxu0 %v1532
        %2007 = vmatmul.bf16.gmra.mxu0 %v883
        %v2008 = vpop.f32.mrf.mxu0
        %v2009 = vadd.f32 %v1854, %v2008
        %v2010 = vpop.f32.mrf.mxu0
        %2011 = vdwg.mxu0
        %2012 = vmatpush.bf16.msra.mxu0 %v1682
        %2013 = vmatpush.bf16.msra.mxu0 %v1672
        %2014 = vmatpush.bf16.msra.mxu0 %v1662
        %2015 = vmatpush.bf16.msra.mxu0 %v1652
        %2016 = vmatpush.bf16.msra.mxu0 %v1642
        %2017 = vmatpush.bf16.msra.mxu0 %v1632
        %2018 = vmatpush.bf16.msra.mxu0 %v1622
        %2019 = vmatpush.bf16.msra.mxu0 %v1612
        %2020 = vmatmul.bf16.gmra.mxu0 %v884
        %v2021 = vpop.f32.mrf.mxu0
        %v2022 = vadd.f32 %v2009, %v2021
        %v2023 = vpop.f32.mrf.mxu0
        %2024 = vdwg.mxu0
        %2025 = vmatpush.bf16.msra.mxu0 %v1603
        %2026 = vmatpush.bf16.msra.mxu0 %v1593
        %2027 = vmatpush.bf16.msra.mxu0 %v1583
        %2028 = vmatpush.bf16.msra.mxu0 %v1573
        %2029 = vmatpush.bf16.msra.mxu0 %v1563
        %2030 = vmatpush.bf16.msra.mxu0 %v1553
        %2031 = vmatpush.bf16.msra.mxu0 %v1543
        %2032 = vmatpush.bf16.msra.mxu0 %v1533
        %2033 = vmatmul.bf16.gmra.mxu0 %v883
        %v2034 = vpop.f32.mrf.mxu0
        %v2035 = vadd.f32 %v1855, %v2034
        %v2036 = vpop.f32.mrf.mxu0
        %2037 = vdwg.mxu0
        %2038 = vmatpush.bf16.msra.mxu0 %v1683
        %2039 = vmatpush.bf16.msra.mxu0 %v1673
        %2040 = vmatpush.bf16.msra.mxu0 %v1663
        %2041 = vmatpush.bf16.msra.mxu0 %v1653
        %2042 = vmatpush.bf16.msra.mxu0 %v1643
        %2043 = vmatpush.bf16.msra.mxu0 %v1633
        %2044 = vmatpush.bf16.msra.mxu0 %v1623
        %2045 = vmatpush.bf16.msra.mxu0 %v1613
        %2046 = vmatmul.bf16.gmra.mxu0 %v884
        %v2047 = vpop.f32.mrf.mxu0
        %v2048 = vadd.f32 %v2035, %v2047
        %v2049 = vpop.f32.mrf.mxu0
        %2050 = vdwg.mxu0
        %2051 = vmatpush.bf16.msra.mxu0 %v1604
        %2052 = vmatpush.bf16.msra.mxu0 %v1594
        %2053 = vmatpush.bf16.msra.mxu0 %v1584
        %2054 = vmatpush.bf16.msra.mxu0 %v1574
        %2055 = vmatpush.bf16.msra.mxu0 %v1564
        %2056 = vmatpush.bf16.msra.mxu0 %v1554
        %2057 = vmatpush.bf16.msra.mxu0 %v1544
        %2058 = vmatpush.bf16.msra.mxu0 %v1534
        %2059 = vmatmul.bf16.gmra.mxu0 %v883
        %v2060 = vpop.f32.mrf.mxu0
        %v2061 = vadd.f32 %v1856, %v2060
        %v2062 = vpop.f32.mrf.mxu0
        %2063 = vdwg.mxu0
        %2064 = vmatpush.bf16.msra.mxu0 %v1684
        %2065 = vmatpush.bf16.msra.mxu0 %v1674
        %2066 = vmatpush.bf16.msra.mxu0 %v1664
        %2067 = vmatpush.bf16.msra.mxu0 %v1654
        %2068 = vmatpush.bf16.msra.mxu0 %v1644
        %2069 = vmatpush.bf16.msra.mxu0 %v1634
        %2070 = vmatpush.bf16.msra.mxu0 %v1624
        %2071 = vmatpush.bf16.msra.mxu0 %v1614
        %2072 = vmatmul.bf16.gmra.mxu0 %v884
        %v2073 = vpop.f32.mrf.mxu0
        %v2074 = vadd.f32 %v2061, %v2073
        %v2075 = vpop.f32.mrf.mxu0
        %2076 = vdwg.mxu0
        %2077 = vmatpush.bf16.msra.mxu0 %v1605
        %2078 = vmatpush.bf16.msra.mxu0 %v1595
        %2079 = vmatpush.bf16.msra.mxu0 %v1585
        %2080 = vmatpush.bf16.msra.mxu0 %v1575
        %2081 = vmatpush.bf16.msra.mxu0 %v1565
        %2082 = vmatpush.bf16.msra.mxu0 %v1555
        %2083 = vmatpush.bf16.msra.mxu0 %v1545
        %2084 = vmatpush.bf16.msra.mxu0 %v1535
        %2085 = vmatmul.bf16.gmra.mxu0 %v883
        %v2086 = vpop.f32.mrf.mxu0
        %v2087 = vadd.f32 %v1857, %v2086
        %v2088 = vpop.f32.mrf.mxu0
        %2089 = vdwg.mxu0
        %2090 = vmatpush.bf16.msra.mxu0 %v1685
        %2091 = vmatpush.bf16.msra.mxu0 %v1675
        %2092 = vmatpush.bf16.msra.mxu0 %v1665
        %2093 = vmatpush.bf16.msra.mxu0 %v1655
        %2094 = vmatpush.bf16.msra.mxu0 %v1645
        %2095 = vmatpush.bf16.msra.mxu0 %v1635
        %2096 = vmatpush.bf16.msra.mxu0 %v1625
        %2097 = vmatpush.bf16.msra.mxu0 %v1615
        %2098 = vmatmul.bf16.gmra.mxu0 %v884
        %v2099 = vpop.f32.mrf.mxu0
        %v2100 = vadd.f32 %v2087, %v2099
        %v2101 = vpop.f32.mrf.mxu0
        %2102 = vdwg.mxu0
        %2103 = vmatpush.bf16.msra.mxu0 %v1606
        %2104 = vmatpush.bf16.msra.mxu0 %v1596
        %2105 = vmatpush.bf16.msra.mxu0 %v1586
        %2106 = vmatpush.bf16.msra.mxu0 %v1576
        %2107 = vmatpush.bf16.msra.mxu0 %v1566
        %2108 = vmatpush.bf16.msra.mxu0 %v1556
        %2109 = vmatpush.bf16.msra.mxu0 %v1546
        %2110 = vmatpush.bf16.msra.mxu0 %v1536
        %2111 = vmatmul.bf16.gmra.mxu0 %v883
        %v2112 = vpop.f32.mrf.mxu0
        %v2113 = vadd.f32 %v1858, %v2112
        %v2114 = vpop.f32.mrf.mxu0
        %2115 = vdwg.mxu0
        %2116 = vmatpush.bf16.msra.mxu0 %v1686
        %2117 = vmatpush.bf16.msra.mxu0 %v1676
        %2118 = vmatpush.bf16.msra.mxu0 %v1666
        %2119 = vmatpush.bf16.msra.mxu0 %v1656
        %2120 = vmatpush.bf16.msra.mxu0 %v1646
        %2121 = vmatpush.bf16.msra.mxu0 %v1636
        %2122 = vmatpush.bf16.msra.mxu0 %v1626
        %2123 = vmatpush.bf16.msra.mxu0 %v1616
        %2124 = vmatmul.bf16.gmra.mxu0 %v884
        %v2125 = vpop.f32.mrf.mxu0
        %v2126 = vadd.f32 %v2113, %v2125
        %v2127 = vpop.f32.mrf.mxu0
        %2128 = vdwg.mxu0
        %v2129 = vperm.slane %v1892, 0
        %v2130 = vperm.slane %v1918, 0
        %v2131 = vmul.f32 %v2129, %v579
        %v2132 = vmul.f32 %v2130, %v580
        %v2133 = vperm.slane %v1944, 0
        %v2134 = vperm.slane %v1970, 0
        %v2135 = vmul.f32 %v2133, %v581
        %v2136 = vmul.f32 %v2134, %v582
        %v2137 = vperm.slane %v1996, 0
        %v2138 = vperm.slane %v2022, 0
        %v2139 = vmul.f32 %v2137, %v583
        %v2140 = vmul.f32 %v2138, %v584
        %v2141 = vperm.slane %v2048, 0
        %v2142 = vperm.slane %v2074, 0
        %v2143 = vmul.f32 %v2141, %v585
        %v2144 = vmul.f32 %v2142, %v586
        %v2145 = vld [vmem:[%s3] sm:$0xff]
        %v2146 = vld [vmem:[%s3 + $0x8] sm:$0xff]
        %v2147 = vld [vmem:[%s4] sm:$0xff]
        %v2148 = vld [vmem:[%s4 + $0x8] sm:$0xff]
        %vm2149 = vcmask 261120
        %v2151 = vsel %vm2149, %v2145, 0
        %v2154 = vsel %vm2149, %v2146, 0
        %2156 = vmatpush.msra.mxu0 0.0
        %2157 = vmatpush.msra.mxu0 0.0
        %2158 = vmatpush.msra.mxu0 0.0
        %2159 = vmatpush.msra.mxu0 0.0
        %2160 = vmatpush.msra.mxu0 0.0
        %2161 = vmatpush.msra.mxu0 0.0
        %2162 = vmatpush.msra.mxu0 0.0
        %2163 = vmatpush.msra.mxu0 0.0
        %2164 = vmatpush.msra.mxu0 0.0
        %2165 = vmatpush.msra.mxu0 0.0
        %2166 = vmatpush.msra.mxu0 0.0
        %2167 = vmatpush.msra.mxu0 0.0
        %2168 = vmatpush.msra.mxu0 %v578
        %2169 = vmatpush.msra.mxu0 %v563
        %2170 = vmatpush.msra.mxu0 %v548
        %2171 = vmatpush.msra.mxu0 %v533
        %2172 = vmatmul.f32.gmra.mxu0 %v2151
        %v2173 = vpop.f32.mrf.mxu0
        %v2174 = vadd.f32 %v2147, %v2173
        %2175 = vmatmul.f32.gmra.mxu0 %v2154
        %v2176 = vpop.f32.mrf.mxu0
        %v2177 = vadd.f32 %v2148, %v2176
        %2178 = vdwg.mxu0
        %v2179 = vld [vmem:[%s5] sm:$0xff]
        %v2180 = vld [vmem:[%s5 + $0x8] sm:$0xff]
        %vm2181 = vcmask 523264
        %v2183 = vsel %vm2181, %v2179, 0
        %v2186 = vsel %vm2181, %v2180, 0
        %2188 = vmatpush.msra.mxu0 0.0
        %2189 = vmatpush.msra.mxu0 0.0
        %2190 = vmatpush.msra.mxu0 0.0
        %2191 = vmatpush.msra.mxu0 0.0
        %2192 = vmatpush.msra.mxu0 0.0
        %2193 = vmatpush.msra.mxu0 0.0
        %2194 = vmatpush.msra.mxu0 0.0
        %2195 = vmatpush.msra.mxu0 0.0
        %2196 = vmatpush.msra.mxu0 %v2143
        %2197 = vmatpush.msra.mxu0 %v2139
        %2198 = vmatpush.msra.mxu0 %v2135
        %2199 = vmatpush.msra.mxu0 %v2131
        %2200 = vmatpush.msra.mxu0 %v585
        %2201 = vmatpush.msra.mxu0 %v583
        %2202 = vmatpush.msra.mxu0 %v581
        %2203 = vmatpush.msra.mxu0 %v579
        %2204 = vmatmul.f32.gmra.mxu0 %v2183
        %v2205 = vpop.f32.mrf.mxu0
        %v2206 = vadd.f32 0.0, %v2205
        %2207 = vmatmul.f32.gmra.mxu0 %v2186
        %v2208 = vpop.f32.mrf.mxu0
        %v2209 = vadd.f32 0.0, %v2208
        %2210 = vdwg.mxu0
        %2211 = vmatpush.msra.mxu0 0.0
        %2212 = vmatpush.msra.mxu0 0.0
        %2213 = vmatpush.msra.mxu0 0.0
        %2214 = vmatpush.msra.mxu0 0.0
        %2215 = vmatpush.msra.mxu0 0.0
        %2216 = vmatpush.msra.mxu0 0.0
        %2217 = vmatpush.msra.mxu0 0.0
        %2218 = vmatpush.msra.mxu0 0.0
        %2219 = vmatpush.msra.mxu0 %v2144
        %2220 = vmatpush.msra.mxu0 %v2140
        %2221 = vmatpush.msra.mxu0 %v2136
        %2222 = vmatpush.msra.mxu0 %v2132
        %2223 = vmatpush.msra.mxu0 %v586
        %2224 = vmatpush.msra.mxu0 %v584
        %2225 = vmatpush.msra.mxu0 %v582
        %2226 = vmatpush.msra.mxu0 %v580
        %2227 = vmatmul.f32.gmra.mxu0 %v2183
        %v2228 = vpop.f32.mrf.mxu0
        %v2229 = vadd.f32 0.0, %v2228
        %2230 = vmatmul.f32.gmra.mxu0 %v2186
        %v2231 = vpop.f32.mrf.mxu0
        %v2232 = vadd.f32 0.0, %v2231
        %2233 = vdwg.mxu0
        %v2234 = vld [vmem:[%s6] sm:$0xff]
        %v2235 = vld [vmem:[%s6 + $0x8] sm:$0xff]
        %2237 = vset.pattern.permute.xlu0 0
        %2238 = vperm.xlu0 %2237, %v2234
        %v2239 = vpop.permute.xlu0 %2238
        %2242 = vset.pattern.permute.xlu0 0
        %2243 = vperm.xlu0 %2242, %v2235
        %v2244 = vpop.permute.xlu0 %2243
        %v2246 = vmul.f32 %v2206, %v2239
        %v2247 = vmul.f32 %v2229, %v2239
        %v2248 = vmul.f32 %v2209, %v2244
        %v2249 = vmul.f32 %v2232, %v2244
        %v2250 = vld [vmem:[%s7] sm:$0xff]
        %v2251 = vld [vmem:[%s7 + $0x8] sm:$0xff]
        %2253 = vset.pattern.permute.xlu0 0
        %2254 = vperm.xlu0 %2253, %v2250
        %v2255 = vpop.permute.xlu0 %2254
        %2258 = vset.pattern.permute.xlu0 0
        %2259 = vperm.xlu0 %2258, %v2251
        %v2260 = vpop.permute.xlu0 %2259
        %v2262 = vadd.f32 %v2246, %v2255
        %v2263 = vadd.f32 %v2247, %v2255
        %v2264 = vadd.f32 %v2248, %v2260
        %v2265 = vadd.f32 %v2249, %v2260
        %v2266 = vmax.f32 %v2262, 0.0
        %v2267 = vmax.f32 %v2263, 0.0
        %v2268 = vmax.f32 %v2264, 0.0
        %v2269 = vmax.f32 %v2265, 0.0
        %v2270 = vperm.slane %v2100, 0
        %v2271 = vperm.slane %v2126, 0
        %v2272 = vmul.f32 %v2266, %v2270
        %v2273 = vmul.f32 %v2267, %v2271
        %v2274 = vmul.f32 %v2268, %v2270
        %v2275 = vmul.f32 %v2269, %v2271
        %2277 = vset.pattern.permute.xlu0 0
        %2278 = vperm.xlu0 %2277, %v2174
        %v2279 = vpop.permute.xlu0 %2278
        %2282 = vset.pattern.permute.xlu0 0
        %2283 = vperm.xlu0 %2282, %v2177
        %v2284 = vpop.permute.xlu0 %2283
        %v2286 = vmul.f32 %v2272, %v2279
        %v2287 = vmul.f32 %v2273, %v2279
        %v2288 = vmul.f32 %v2274, %v2284
        %v2289 = vmul.f32 %v2275, %v2284
        %2290 = vst [vmem:[%s439] sm:$0xff] %v2286
        %2291 = vst [vmem:[%s439 + $0x8] sm:$0xff] %v2287
        %2292 = vst [vmem:[%s439 + $0x10] sm:$0xff] %v2288
        %2293 = vst [vmem:[%s439 + $0x18] sm:$0xff] %v2289
        %s2294 = sand.u32 %s273, 1
        %s2295 = scalar_lea.sflag [#allocation4], %s2294
        %s2296 = sand.u32 %s273, 1
        %s2297 = smul.addr %s2296, 32
        %s2298 = scalar_lea.vmem [#allocation8], %s2297
        // Predicated region
        $region77: #{tpu_custom_call.1} parent=63 // pred_check
          %p2299 = pneg %p283
        $region78: #{tpu_custom_call.1} parent=63 // pred_check_branch
          %2301 = sbr.rel (%p2299) target = $region80
        $region79: #{tpu_custom_call.1} parent=63 // pred_region
          %2303 = vsyncadd %s2295, 0
          %s2304 = smul.addr %s29, 4
          %s2305 = smul.addr %s2304, 8
          %s2306 = scalar_lea.hbm %s11, %s2305
          %s2307 = sshll.u32 %s2298, 4
          %s2308 = int_to_ptr.vmem [resolvable:$true] %s2307
          %s2309 = sshll.u32 %s2306, 4
          %s2310 = int_to_ptr.hbm [resolvable:$true] %s2309
          %2315 = dma.vmem_to_hbm [thread:$0]  %s2308, 512, %s2310, %s2295, 256, 256, 16
        $region80: #{tpu_custom_call.1} parent=63 // pred_fallthru
          _
      $region64: #{tpu_custom_call.1} parent=5 // pred_fallthru
        _
      %p2316 = scmp.le.s32.totalorder 2, %s24
      // Predicated region
      $region81: #{tpu_custom_call.1} parent=5 // pred_check
        %p2317 = pneg %p2316
      $region82: #{tpu_custom_call.1} parent=5 // pred_check_branch
        %2319 = sbr.rel (%p2317) target = $region84
      $region83: #{tpu_custom_call.1} parent=5 // pred_region
        %s2320 = ssub.s32 %s24, 2
        // Predicated region
        $region85: #{tpu_custom_call.1} parent=83 // pred_check
          %p2321 = pneg %p289
        $region86: #{tpu_custom_call.1} parent=83 // pred_check_branch
          %2323 = sbr.rel (%p2321) target = $region88
        $region87: #{tpu_custom_call.1} parent=83 // pred_region
          %s2324 = sand.u32 %s274, 1
          %s2325 = scalar_lea.sflag [#allocation4], %s2324
          %s2326 = sand.u32 %s274, 1
          %s2327 = smul.addr %s2326, 32
          %s2328 = scalar_lea.vmem [#allocation8], %s2327
          %2330 = dma.done %s2325, 512
        $region88: #{tpu_custom_call.1} parent=83 // pred_fallthru
          _
      $region84: #{tpu_custom_call.1} parent=5 // pred_fallthru
        _
    $region6: #{tpu_custom_call.1} parent=1 // loop_footer
      %s28 = sadd.s32 1, %s24
    $region7: #{tpu_custom_call.1} parent=1 // loop_footer_branch
      %23 = sbr.rel target = $region3
    $region8: #{tpu_custom_call.1} parent=1 // loop_exit
      _
    %2331 = vsyncpa [#allocation3], 1
    %s2332 = scalar_lea.sflag [#allocation3], 1
    %2333 = vsyncpa %s2332, 1
    %2334 = vsyncpa [#allocation6], 1
    %2335 = vsyncpa [#allocation4], 1
    %s2336 = scalar_lea.sflag [#allocation4], 1
    %2337 = vsyncpa %s2336, 1

</llo_original>
